<compile_context>
chip_gen: v7x
topology: tpu7x:2x2x1
jax: 0.10.0
libtpu: 0.0.40
codegen_flags: <defaults>
</compile_context>

<pallas_src>
import functools

import numpy as np
import jax
import jax.numpy as jnp
from jax import lax
from jax.experimental import pallas as pl
from jax.experimental.pallas import tpu as pltpu

EPS = 1e-5

# Lane tiles are multiples of 128 (lane-dense stores).  The pt-dependent VMEM
# blocks (patches scratch + double-buffered output block) are kept under this
# budget so the tile choice is safe on v5e (16 MiB default scoped VMEM) and
# v7x (64 MiB physical VMEM); on v6e the explicit vmem_limit_bytes below allows
# larger working sets when needed.
_VMEM_TILE_BUDGET = 16 * 2**20
_MAX_P_TILE = 1024


def _round_up(x, m):
    return (x + m - 1) // m * m


def _choose_tile(p_req, n_batch, cin, rows_out):
    """Pick the lane tile pt (multiple of 128) and padded output lane count P (pt | P)."""
    p128 = _round_up(p_req, 128)
    per_lane = 4 * (27 * cin + 2 * rows_out)            # patches + 2x output block
    budget_pt = max(128, _VMEM_TILE_BUDGET // per_lane // 128 * 128)
    pt = int(min(_MAX_P_TILE, budget_pt, p128))
    # v7x megacore balance: ensure at least 2 programs when the batch is 1.
    if n_batch * ((p128 + pt - 1) // pt) < 2 and p128 >= 256:
        pt = _round_up(p128 // 2, 128)
    return pt, _round_up(p128, pt)


# ----------------------------------------------------------------------------
# Pallas kernels (channels-first: rows = channels, lanes = flattened spatial P)
# ----------------------------------------------------------------------------
def _conv_kernel(x_ref, w_ref, b_ref, o_ref, patches_ref, *,
                 offsets, cin, pt, n_tiles):
    """Fused conv + BN + ReLU tile: o = relu(W_scaled @ patches + shift).

    x_ref:       (Cin, L_in)     raw flattened activation for one batch element
    w_ref:       (Cout, 27*Cin)  conv weight, taps ordered (kd,kh,kw,c), BN scale folded
    b_ref:       (Cout, 1)       per-channel shift (conv bias + eval-mode BN folded)
    o_ref:       (Cout, pt)
    patches_ref: (27*Cin, pt)    VMEM scratch, built from static lane offsets
    """
    base = 0 if n_tiles == 1 else pl.multiple_of(pl.program_id(1) * pt, 128)
    for t, off in enumerate(offsets):                    # 27 static tap offsets
        patches_ref[t * cin:(t + 1) * cin, :] = x_ref[:, pl.ds(base + off, pt)]
    acc = jnp.dot(w_ref[...], patches_ref[...], preferred_element_type=jnp.float32)
    o_ref[...] = jnp.maximum(acc + b_ref[...], 0.0).astype(o_ref.dtype)


def _conv_up_kernel(x_ref, w_ref, b_ref, wu_ref, bu_ref, o_ref, patches_ref, *,
                    offsets, cin, pt, n_tiles):
    """conv2 + BN + ReLU + ConvTranspose3d(k=2, s=2) fused in VMEM.

    wu_ref: (8*Cup, Cout)  one (Cup, Cout) block per output offset (i,j,l)
    bu_ref: (8*Cup, 1)
    o_ref:  (8*Cup, pt)
    """
    base = 0 if n_tiles == 1 else pl.multiple_of(pl.program_id(1) * pt, 128)
    for t, off in enumerate(offsets):
        patches_ref[t * cin:(t + 1) * cin, :] = x_ref[:, pl.ds(base + off, pt)]
    acc = jnp.dot(w_ref[...], patches_ref[...], preferred_element_type=jnp.float32)
    y = jnp.maximum(acc + b_ref[...], 0.0)                       # conv2 + BN + ReLU
    out = jnp.dot(wu_ref[...], y, preferred_element_type=jnp.float32) + bu_ref[...]
    o_ref[...] = out.astype(o_ref.dtype)


# ----------------------------------------------------------------------------
# pallas_call wrappers
# ----------------------------------------------------------------------------
def _conv_bn_relu(x_flat, w, b, *, offsets, p_out, pt):
    """x_flat: (N, Cin, L_in); w: (Cout, 27*Cin); b: (Cout, 1) -> (N, Cout, p_out)."""
    N, Cin, L_in = x_flat.shape
    Cout = w.shape[0]
    n_tiles = p_out // pt
    est = 4 * (2 * Cin * L_in + 2 * Cout * pt + 27 * Cin * pt + w.size + 2 * Cout)
    kern = functools.partial(_conv_kernel, offsets=offsets, cin=Cin, pt=pt,
                             n_tiles=n_tiles)
    return pl.pallas_call(
        kern,
        out_shape=jax.ShapeDtypeStruct((N, Cout, p_out), jnp.float32),
        grid=(N, n_tiles),
        in_specs=[
            pl.BlockSpec((None, Cin, L_in), lambda n, p: (n, 0, 0)),  # raw act; no re-fetch over p
            pl.BlockSpec((Cout, 27 * Cin), lambda n, p: (0, 0)),      # grid-invariant
            pl.BlockSpec((Cout, 1), lambda n, p: (0, 0)),             # grid-invariant
        ],
        out_specs=pl.BlockSpec((None, Cout, pt), lambda n, p: (n, 0, p)),
        scratch_shapes=[pltpu.VMEM((27 * Cin, pt), jnp.float32)],
        compiler_params=pltpu.CompilerParams(
            dimension_semantics=("parallel", "parallel"),
            vmem_limit_bytes=int(min(64 * 2**20, max(16 * 2**20, 2 * est)))),
    )(x_flat, w, b)


def _conv_bn_relu_upconv(x_flat, w, b, wu, bu, *, offsets, p_out, pt):
    """x_flat: (N, Cin, L_in); w: (Cout, 27*Cin); b: (Cout, 1); wu: (8*Cup, Cout);
    bu: (8*Cup, 1) -> (N, 8*Cup, p_out)."""
    N, Cin, L_in = x_flat.shape
    Cout = w.shape[0]
    Cup8 = wu.shape[0]
    n_tiles = p_out // pt
    est = 4 * (2 * Cin * L_in + 2 * Cup8 * pt + 27 * Cin * pt
               + w.size + wu.size + 2 * Cout + 2 * Cup8)
    kern = functools.partial(_conv_up_kernel, offsets=offsets, cin=Cin, pt=pt,
                             n_tiles=n_tiles)
    return pl.pallas_call(
        kern,
        out_shape=jax.ShapeDtypeStruct((N, Cup8, p_out), jnp.float32),
        grid=(N, n_tiles),
        in_specs=[
            pl.BlockSpec((None, Cin, L_in), lambda n, p: (n, 0, 0)),
            pl.BlockSpec((Cout, 27 * Cin), lambda n, p: (0, 0)),
            pl.BlockSpec((Cout, 1), lambda n, p: (0, 0)),
            pl.BlockSpec((Cup8, Cout), lambda n, p: (0, 0)),
            pl.BlockSpec((Cup8, 1), lambda n, p: (0, 0)),
        ],
        out_specs=pl.BlockSpec((None, Cup8, pt), lambda n, p: (n, 0, p)),
        scratch_shapes=[pltpu.VMEM((27 * Cin, pt), jnp.float32)],
        compiler_params=pltpu.CompilerParams(
            dimension_semantics=("parallel", "parallel"),
            vmem_limit_bytes=int(min(64 * 2**20, max(16 * 2**20, 2 * est)))),
    )(x_flat, w, b, wu, bu)


# ----------------------------------------------------------------------------
# Plain-JAX glue (BN folding, lane geometry, final offset interleave)
# ----------------------------------------------------------------------------
def _fold_conv_bn(conv_w, conv_b, gamma, beta, mean, var, norm):
    """(Cout, Cin, 3,3,3) -> (Cout, 27*Cin) with taps ordered (kd,kh,kw,c) and BN
    scale folded into the rows; plus per-channel shift (Cout, 1)."""
    Cout, Cin = conv_w.shape[:2]
    w2d = jnp.transpose(conv_w, (0, 2, 3, 4, 1)).reshape(Cout, 27 * Cin)
    if norm:
        s = gamma / jnp.sqrt(var + EPS)
        w2d = w2d * s[:, None]
        shift = (conv_b - mean) * s + beta
    else:
        shift = conv_b
    return w2d, shift[:, None]


def decoder_block3d_forward(x, params, norm=True):
    """Pallas implementation of DecoderBlock3d.forward (activation = ReLU)."""
    N, C1, D, H, W = x.shape
    HW = H * W
    Do1, Ho1, Wo1 = D - 2, H - 2, W - 2
    Do2, Ho2, Wo2 = Do1 - 2, Ho1 - 2, Wo1 - 2
    C2 = params["conv1_w"].shape[0]
    C3 = params["conv2_w"].shape[0]

    # Static tap offsets within the flat (d*HW + h*W + w) lane axis, ordered
    # (kd, kh, kw) to match the reordered weight rows.  Both convs use the same
    # offsets because activations keep the ORIGINAL (HW, W, 1) strides throughout.
    offsets = tuple(kd * HW + kh * W + kw
                    for kd in range(3) for kh in range(3) for kw in range(3))
    maxoff = offsets[-1]                                  # 2*HW + 2*W + 2

    # Lane geometry: all lengths are 128-multiples (lane-dense stores).  Columns
    # with h >= Ho or w >= Wo hold garbage that valid downstream positions never
    # read; they are sliced off only at the end.
    pt2, P2 = _choose_tile(Do2 * HW, N, C2, 8 * C3)
    L2 = _round_up(P2 + maxoff, 128)                      # y1 lanes stage 2 reads
    pt1, P1 = _choose_tile(max(Do1 * HW, L2), N, C1, C2)
    L1 = _round_up(P1 + maxoff, 128)                      # x lanes stage 1 reads

    # Fold conv bias + eval-mode BN into (scaled weights, per-channel shift).
    w1, b1 = _fold_conv_bn(params["conv1_w"], params["conv1_b"],
                           params["bn1_gamma"], params["bn1_beta"],
                           params["bn1_mean"], params["bn1_var"], norm)
    w2, b2 = _fold_conv_bn(params["conv2_w"], params["conv2_b"],
                           params["bn2_gamma"], params["bn2_beta"],
                           params["bn2_mean"], params["bn2_var"], norm)
    # ConvTranspose3d(C3, C3, 2, 2): weight (Cin, Cout, i, j, l) -> rows (i, j, l, o).
    wu = jnp.transpose(params["up_w"], (2, 3, 4, 1, 0)).reshape(8 * C3, C3)
    bu = jnp.tile(params["up_b"], 8)[:, None]

    # ---- conv1 + BN1 + ReLU (taps built in-kernel, no HBM im2col) ------------
    x_flat = jnp.pad(x.reshape(N, C1, D * HW), ((0, 0), (0, 0), (0, L1 - D * HW)))
    y1 = _conv_bn_relu(x_flat, w1, b1, offsets=offsets, p_out=P1, pt=pt1)

    # ---- conv2 + BN2 + ReLU + upconv (one fused kernel; y1 feeds it directly) -
    out8 = _conv_bn_relu_upconv(y1, w2, b2, wu, bu, offsets=offsets, p_out=P2, pt=pt2)

    # ---- drop garbage columns and interleave the 8 stride-2 offsets (NCDHW) ---
    out8 = out8[:, :, :Do2 * HW].reshape(N, 2, 2, 2, C3, Do2, H, W)
    out8 = out8[..., :Ho2, :Wo2]                          # (n, i, j, l, c, d, h, w)
    out = jnp.transpose(out8, (0, 4, 5, 1, 6, 2, 7, 3))   # (n, c, d, i, h, j, w, l)
    return out.reshape(N, C3, 2 * Do2, 2 * Ho2, 2 * Wo2)


# ----------------------------------------------------------------------------
# Pure-JAX reference (for correctness check)
# ----------------------------------------------------------------------------
def reference_forward(x_ncdhw, params, norm=True):
    x = jnp.transpose(x_ncdhw, (0, 2, 3, 4, 1))
    dn = ("NDHWC", "DHWIO", "NDHWC")

    def conv(x, w, b):
        return lax.conv_general_dilated(
            x, jnp.transpose(w, (2, 3, 4, 1, 0)), (1, 1, 1), "VALID",
            dimension_numbers=dn) + b

    def bn(x, g, be, m, v):
        return (x - m) / jnp.sqrt(v + EPS) * g + be

    y = conv(x, params["conv1_w"], params["conv1_b"])
    if norm:
        y = bn(y, params["bn1_gamma"], params["bn1_beta"], params["bn1_mean"], params["bn1_var"])
    y = jnp.maximum(y, 0.0)
    y = conv(y, params["conv2_w"], params["conv2_b"])
    if norm:
        y = bn(y, params["bn2_gamma"], params["bn2_beta"], params["bn2_mean"], params["bn2_var"])
    y = jnp.maximum(y, 0.0)
    # ConvTranspose3d k=2, s=2: out[n, 2d+i, 2h+j, 2w+l, o] = sum_c y[n,d,h,w,c] * W[c,o,i,j,l]
    z = jnp.einsum("ndhwc,coijl->ndihjwlo", y, params["up_w"])
    N, D2, _, H2, _, W2, _, Co = z.shape
    z = z.reshape(N, 2 * D2, 2 * H2, 2 * W2, Co) + params["up_b"]
    return jnp.transpose(z, (0, 4, 1, 2, 3))


# ----------------------------------------------------------------------------
if __name__ == "__main__":
    N, C1, C2, C3, S = 2, 4, 8, 8, 8  # dim1=4, dim2=8, dim3=8, spatial 8^3

    keys = jax.random.split(jax.random.PRNGKey(0), 16)
    params = {
        "conv1_w": 0.1 * jax.random.normal(keys[0], (C2, C1, 3, 3, 3), jnp.float32),
        "conv1_b": 0.1 * jax.random.normal(keys[1], (C2,), jnp.float32),
        "conv2_w": 0.1 * jax.random.normal(keys[2], (C3, C2, 3, 3, 3), jnp.float32),
        "conv2_b": 0.1 * jax.random.normal(keys[3], (C3,), jnp.float32),
        "up_w":    0.1 * jax.random.normal(keys[4], (C3, C3, 2, 2, 2), jnp.float32),
        "up_b":    0.1 * jax.random.normal(keys[5], (C3,), jnp.float32),
        "bn1_gamma": 1.0 + 0.1 * jax.random.normal(keys[6], (C2,), jnp.float32),
        "bn1_beta":  0.1 * jax.random.normal(keys[7], (C2,), jnp.float32),
        "bn1_mean":  0.1 * jax.random.normal(keys[8], (C2,), jnp.float32),
        "bn1_var":   jax.random.uniform(keys[9], (C2,), jnp.float32, 0.5, 1.5),
        "bn2_gamma": 1.0 + 0.1 * jax.random.normal(keys[10], (C3,), jnp.float32),
        "bn2_beta":  0.1 * jax.random.normal(keys[11], (C3,), jnp.float32),
        "bn2_mean":  0.1 * jax.random.normal(keys[12], (C3,), jnp.float32),
        "bn2_var":   jax.random.uniform(keys[13], (C3,), jnp.float32, 0.5, 1.5),
    }
    x = jax.random.normal(keys[14], (N, C1, S, S, S), jnp.float32)  # NCDHW

    out = decoder_block3d_forward(x, params, norm=True)
    out = jax.block_until_ready(out)

    ref = reference_forward(x, params, norm=True)
    assert out.shape == (N, C3, 8, 8, 8), out.shape
    np.testing.assert_allclose(np.asarray(out), np.asarray(ref), atol=1e-4, rtol=1e-4)

    print("KERNEL_OK")
</pallas_src>

<mosaic_0001>
module attributes {stable_mosaic.version = 11 : i64} {
  func.func @_conv_kernel(%arg0: i32, %arg1: i32, %arg2: memref<1x4x768xf32, #tpu.memory_space<vmem>>, %arg3: memref<8x108xf32, #tpu.memory_space<vmem>>, %arg4: memref<8x1xf32, #tpu.memory_space<vmem>>, %arg5: memref<1x8x512xf32, #tpu.memory_space<vmem>>, %arg6: memref<108x512xf32, #tpu.memory_space<vmem>>) attributes {dimension_semantics = [#tpu.dimension_semantics<parallel>, #tpu.dimension_semantics<parallel>], iteration_bounds = array<i64: 2, 1>, scalar_prefetch = 0 : i64, scratch_operands = 1 : i64, tpu.core_type = #tpu.core_type<tc>, window_params = [{transform_indices = @transform_0, window_bounds = array<i64: 1, 4, 768>}, {pipeline_mode = #tpu.pipeline_mode<synchronous>, transform_indices = @transform_1, window_bounds = array<i64: 8, 108>}, {pipeline_mode = #tpu.pipeline_mode<synchronous>, transform_indices = @transform_2, window_bounds = array<i64: 8, 1>}, {transform_indices = @transform_3, window_bounds = array<i64: 1, 8, 512>}]} {
    %c0 = arith.constant 0 : index
    %c0_0 = arith.constant 0 : index
    %c0_1 = arith.constant 0 : index
    %0 = vector.load %arg2[%c0, %c0_0, %c0_1] : memref<1x4x768xf32, #tpu.memory_space<vmem>>, vector<1x4x512xf32>
    %1 = vector.shape_cast %0 : vector<1x4x512xf32> to vector<4x512xf32>
    %c0_2 = arith.constant 0 : index
    %c0_3 = arith.constant 0 : index
    %2 = vector.load %arg6[%c0_2, %c0_3] : memref<108x512xf32, #tpu.memory_space<vmem>>, vector<4x512xf32>
    tpu.vector_store %arg6[%c0_2, %c0_3], %1 {strides = array<i32>} : memref<108x512xf32, #tpu.memory_space<vmem>>, vector<4x512xf32>,
    %c0_4 = arith.constant 0 : index
    %c0_5 = arith.constant 0 : index
    %c1 = arith.constant 1 : index
    %3 = vector.load %arg2[%c0_4, %c0_5, %c1] : memref<1x4x768xf32, #tpu.memory_space<vmem>>, vector<1x4x512xf32>
    %4 = vector.shape_cast %3 : vector<1x4x512xf32> to vector<4x512xf32>
    %c4 = arith.constant 4 : index
    %c0_6 = arith.constant 0 : index
    %5 = vector.load %arg6[%c4, %c0_6] : memref<108x512xf32, #tpu.memory_space<vmem>>, vector<4x512xf32>
    tpu.vector_store %arg6[%c4, %c0_6], %4 {strides = array<i32>} : memref<108x512xf32, #tpu.memory_space<vmem>>, vector<4x512xf32>,
    %c0_7 = arith.constant 0 : index
    %c0_8 = arith.constant 0 : index
    %c2 = arith.constant 2 : index
    %6 = vector.load %arg2[%c0_7, %c0_8, %c2] : memref<1x4x768xf32, #tpu.memory_space<vmem>>, vector<1x4x512xf32>
    %7 = vector.shape_cast %6 : vector<1x4x512xf32> to vector<4x512xf32>
    %c8 = arith.constant 8 : index
    %c0_9 = arith.constant 0 : index
    %8 = vector.load %arg6[%c8, %c0_9] : memref<108x512xf32, #tpu.memory_space<vmem>>, vector<4x512xf32>
    tpu.vector_store %arg6[%c8, %c0_9], %7 {strides = array<i32>} : memref<108x512xf32, #tpu.memory_space<vmem>>, vector<4x512xf32>,
    %c0_10 = arith.constant 0 : index
    %c0_11 = arith.constant 0 : index
    %c8_12 = arith.constant 8 : index
    %9 = vector.load %arg2[%c0_10, %c0_11, %c8_12] : memref<1x4x768xf32, #tpu.memory_space<vmem>>, vector<1x4x512xf32>
    %10 = vector.shape_cast %9 : vector<1x4x512xf32> to vector<4x512xf32>
    %c12 = arith.constant 12 : index
    %c0_13 = arith.constant 0 : index
    %11 = vector.load %arg6[%c12, %c0_13] : memref<108x512xf32, #tpu.memory_space<vmem>>, vector<4x512xf32>
    tpu.vector_store %arg6[%c12, %c0_13], %10 {strides = array<i32>} : memref<108x512xf32, #tpu.memory_space<vmem>>, vector<4x512xf32>,
    %c0_14 = arith.constant 0 : index
    %c0_15 = arith.constant 0 : index
    %c9 = arith.constant 9 : index
    %12 = vector.load %arg2[%c0_14, %c0_15, %c9] : memref<1x4x768xf32, #tpu.memory_space<vmem>>, vector<1x4x512xf32>
    %13 = vector.shape_cast %12 : vector<1x4x512xf32> to vector<4x512xf32>
    %c16 = arith.constant 16 : index
    %c0_16 = arith.constant 0 : index
    %14 = vector.load %arg6[%c16, %c0_16] : memref<108x512xf32, #tpu.memory_space<vmem>>, vector<4x512xf32>
    tpu.vector_store %arg6[%c16, %c0_16], %13 {strides = array<i32>} : memref<108x512xf32, #tpu.memory_space<vmem>>, vector<4x512xf32>,
    %c0_17 = arith.constant 0 : index
    %c0_18 = arith.constant 0 : index
    %c10 = arith.constant 10 : index
    %15 = vector.load %arg2[%c0_17, %c0_18, %c10] : memref<1x4x768xf32, #tpu.memory_space<vmem>>, vector<1x4x512xf32>
    %16 = vector.shape_cast %15 : vector<1x4x512xf32> to vector<4x512xf32>
    %c20 = arith.constant 20 : index
    %c0_19 = arith.constant 0 : index
    %17 = vector.load %arg6[%c20, %c0_19] : memref<108x512xf32, #tpu.memory_space<vmem>>, vector<4x512xf32>
    tpu.vector_store %arg6[%c20, %c0_19], %16 {strides = array<i32>} : memref<108x512xf32, #tpu.memory_space<vmem>>, vector<4x512xf32>,
    %c0_20 = arith.constant 0 : index
    %c0_21 = arith.constant 0 : index
    %c16_22 = arith.constant 16 : index
    %18 = vector.load %arg2[%c0_20, %c0_21, %c16_22] : memref<1x4x768xf32, #tpu.memory_space<vmem>>, vector<1x4x512xf32>
    %19 = vector.shape_cast %18 : vector<1x4x512xf32> to vector<4x512xf32>
    %c24 = arith.constant 24 : index
    %c0_23 = arith.constant 0 : index
    %20 = vector.load %arg6[%c24, %c0_23] : memref<108x512xf32, #tpu.memory_space<vmem>>, vector<4x512xf32>
    tpu.vector_store %arg6[%c24, %c0_23], %19 {strides = array<i32>} : memref<108x512xf32, #tpu.memory_space<vmem>>, vector<4x512xf32>,
    %c0_24 = arith.constant 0 : index
    %c0_25 = arith.constant 0 : index
    %c17 = arith.constant 17 : index
    %21 = vector.load %arg2[%c0_24, %c0_25, %c17] : memref<1x4x768xf32, #tpu.memory_space<vmem>>, vector<1x4x512xf32>
    %22 = vector.shape_cast %21 : vector<1x4x512xf32> to vector<4x512xf32>
    %c28 = arith.constant 28 : index
    %c0_26 = arith.constant 0 : index
    %23 = vector.load %arg6[%c28, %c0_26] : memref<108x512xf32, #tpu.memory_space<vmem>>, vector<4x512xf32>
    tpu.vector_store %arg6[%c28, %c0_26], %22 {strides = array<i32>} : memref<108x512xf32, #tpu.memory_space<vmem>>, vector<4x512xf32>,
    %c0_27 = arith.constant 0 : index
    %c0_28 = arith.constant 0 : index
    %c18 = arith.constant 18 : index
    %24 = vector.load %arg2[%c0_27, %c0_28, %c18] : memref<1x4x768xf32, #tpu.memory_space<vmem>>, vector<1x4x512xf32>
    %25 = vector.shape_cast %24 : vector<1x4x512xf32> to vector<4x512xf32>
    %c32 = arith.constant 32 : index
    %c0_29 = arith.constant 0 : index
    %26 = vector.load %arg6[%c32, %c0_29] : memref<108x512xf32, #tpu.memory_space<vmem>>, vector<4x512xf32>
    tpu.vector_store %arg6[%c32, %c0_29], %25 {strides = array<i32>} : memref<108x512xf32, #tpu.memory_space<vmem>>, vector<4x512xf32>,
    %c0_30 = arith.constant 0 : index
    %c0_31 = arith.constant 0 : index
    %c64 = arith.constant 64 : index
    %27 = vector.load %arg2[%c0_30, %c0_31, %c64] : memref<1x4x768xf32, #tpu.memory_space<vmem>>, vector<1x4x512xf32>
    %28 = vector.shape_cast %27 : vector<1x4x512xf32> to vector<4x512xf32>
    %c36 = arith.constant 36 : index
    %c0_32 = arith.constant 0 : index
    %29 = vector.load %arg6[%c36, %c0_32] : memref<108x512xf32, #tpu.memory_space<vmem>>, vector<4x512xf32>
    tpu.vector_store %arg6[%c36, %c0_32], %28 {strides = array<i32>} : memref<108x512xf32, #tpu.memory_space<vmem>>, vector<4x512xf32>,
    %c0_33 = arith.constant 0 : index
    %c0_34 = arith.constant 0 : index
    %c65 = arith.constant 65 : index
    %30 = vector.load %arg2[%c0_33, %c0_34, %c65] : memref<1x4x768xf32, #tpu.memory_space<vmem>>, vector<1x4x512xf32>
    %31 = vector.shape_cast %30 : vector<1x4x512xf32> to vector<4x512xf32>
    %c40 = arith.constant 40 : index
    %c0_35 = arith.constant 0 : index
    %32 = vector.load %arg6[%c40, %c0_35] : memref<108x512xf32, #tpu.memory_space<vmem>>, vector<4x512xf32>
    tpu.vector_store %arg6[%c40, %c0_35], %31 {strides = array<i32>} : memref<108x512xf32, #tpu.memory_space<vmem>>, vector<4x512xf32>,
    %c0_36 = arith.constant 0 : index
    %c0_37 = arith.constant 0 : index
    %c66 = arith.constant 66 : index
    %33 = vector.load %arg2[%c0_36, %c0_37, %c66] : memref<1x4x768xf32, #tpu.memory_space<vmem>>, vector<1x4x512xf32>
    %34 = vector.shape_cast %33 : vector<1x4x512xf32> to vector<4x512xf32>
    %c44 = arith.constant 44 : index
    %c0_38 = arith.constant 0 : index
    %35 = vector.load %arg6[%c44, %c0_38] : memref<108x512xf32, #tpu.memory_space<vmem>>, vector<4x512xf32>
    tpu.vector_store %arg6[%c44, %c0_38], %34 {strides = array<i32>} : memref<108x512xf32, #tpu.memory_space<vmem>>, vector<4x512xf32>,
    %c0_39 = arith.constant 0 : index
    %c0_40 = arith.constant 0 : index
    %c72 = arith.constant 72 : index
    %36 = vector.load %arg2[%c0_39, %c0_40, %c72] : memref<1x4x768xf32, #tpu.memory_space<vmem>>, vector<1x4x512xf32>
    %37 = vector.shape_cast %36 : vector<1x4x512xf32> to vector<4x512xf32>
    %c48 = arith.constant 48 : index
    %c0_41 = arith.constant 0 : index
    %38 = vector.load %arg6[%c48, %c0_41] : memref<108x512xf32, #tpu.memory_space<vmem>>, vector<4x512xf32>
    tpu.vector_store %arg6[%c48, %c0_41], %37 {strides = array<i32>} : memref<108x512xf32, #tpu.memory_space<vmem>>, vector<4x512xf32>,
    %c0_42 = arith.constant 0 : index
    %c0_43 = arith.constant 0 : index
    %c73 = arith.constant 73 : index
    %39 = vector.load %arg2[%c0_42, %c0_43, %c73] : memref<1x4x768xf32, #tpu.memory_space<vmem>>, vector<1x4x512xf32>
    %40 = vector.shape_cast %39 : vector<1x4x512xf32> to vector<4x512xf32>
    %c52 = arith.constant 52 : index
    %c0_44 = arith.constant 0 : index
    %41 = vector.load %arg6[%c52, %c0_44] : memref<108x512xf32, #tpu.memory_space<vmem>>, vector<4x512xf32>
    tpu.vector_store %arg6[%c52, %c0_44], %40 {strides = array<i32>} : memref<108x512xf32, #tpu.memory_space<vmem>>, vector<4x512xf32>,
    %c0_45 = arith.constant 0 : index
    %c0_46 = arith.constant 0 : index
    %c74 = arith.constant 74 : index
    %42 = vector.load %arg2[%c0_45, %c0_46, %c74] : memref<1x4x768xf32, #tpu.memory_space<vmem>>, vector<1x4x512xf32>
    %43 = vector.shape_cast %42 : vector<1x4x512xf32> to vector<4x512xf32>
    %c56 = arith.constant 56 : index
    %c0_47 = arith.constant 0 : index
    %44 = vector.load %arg6[%c56, %c0_47] : memref<108x512xf32, #tpu.memory_space<vmem>>, vector<4x512xf32>
    tpu.vector_store %arg6[%c56, %c0_47], %43 {strides = array<i32>} : memref<108x512xf32, #tpu.memory_space<vmem>>, vector<4x512xf32>,
    %c0_48 = arith.constant 0 : index
    %c0_49 = arith.constant 0 : index
    %c80 = arith.constant 80 : index
    %45 = vector.load %arg2[%c0_48, %c0_49, %c80] : memref<1x4x768xf32, #tpu.memory_space<vmem>>, vector<1x4x512xf32>
    %46 = vector.shape_cast %45 : vector<1x4x512xf32> to vector<4x512xf32>
    %c60 = arith.constant 60 : index
    %c0_50 = arith.constant 0 : index
    %47 = vector.load %arg6[%c60, %c0_50] : memref<108x512xf32, #tpu.memory_space<vmem>>, vector<4x512xf32>
    tpu.vector_store %arg6[%c60, %c0_50], %46 {strides = array<i32>} : memref<108x512xf32, #tpu.memory_space<vmem>>, vector<4x512xf32>,
    %c0_51 = arith.constant 0 : index
    %c0_52 = arith.constant 0 : index
    %c81 = arith.constant 81 : index
    %48 = vector.load %arg2[%c0_51, %c0_52, %c81] : memref<1x4x768xf32, #tpu.memory_space<vmem>>, vector<1x4x512xf32>
    %49 = vector.shape_cast %48 : vector<1x4x512xf32> to vector<4x512xf32>
    %c64_53 = arith.constant 64 : index
    %c0_54 = arith.constant 0 : index
    %50 = vector.load %arg6[%c64_53, %c0_54] : memref<108x512xf32, #tpu.memory_space<vmem>>, vector<4x512xf32>
    tpu.vector_store %arg6[%c64_53, %c0_54], %49 {strides = array<i32>} : memref<108x512xf32, #tpu.memory_space<vmem>>, vector<4x512xf32>,
    %c0_55 = arith.constant 0 : index
    %c0_56 = arith.constant 0 : index
    %c82 = arith.constant 82 : index
    %51 = vector.load %arg2[%c0_55, %c0_56, %c82] : memref<1x4x768xf32, #tpu.memory_space<vmem>>, vector<1x4x512xf32>
    %52 = vector.shape_cast %51 : vector<1x4x512xf32> to vector<4x512xf32>
    %c68 = arith.constant 68 : index
    %c0_57 = arith.constant 0 : index
    %53 = vector.load %arg6[%c68, %c0_57] : memref<108x512xf32, #tpu.memory_space<vmem>>, vector<4x512xf32>
    tpu.vector_store %arg6[%c68, %c0_57], %52 {strides = array<i32>} : memref<108x512xf32, #tpu.memory_space<vmem>>, vector<4x512xf32>,
    %c0_58 = arith.constant 0 : index
    %c0_59 = arith.constant 0 : index
    %c128 = arith.constant 128 : index
    %54 = vector.load %arg2[%c0_58, %c0_59, %c128] : memref<1x4x768xf32, #tpu.memory_space<vmem>>, vector<1x4x512xf32>
    %55 = vector.shape_cast %54 : vector<1x4x512xf32> to vector<4x512xf32>
    %c72_60 = arith.constant 72 : index
    %c0_61 = arith.constant 0 : index
    %56 = vector.load %arg6[%c72_60, %c0_61] : memref<108x512xf32, #tpu.memory_space<vmem>>, vector<4x512xf32>
    tpu.vector_store %arg6[%c72_60, %c0_61], %55 {strides = array<i32>} : memref<108x512xf32, #tpu.memory_space<vmem>>, vector<4x512xf32>,
    %c0_62 = arith.constant 0 : index
    %c0_63 = arith.constant 0 : index
    %c129 = arith.constant 129 : index
    %57 = vector.load %arg2[%c0_62, %c0_63, %c129] : memref<1x4x768xf32, #tpu.memory_space<vmem>>, vector<1x4x512xf32>
    %58 = vector.shape_cast %57 : vector<1x4x512xf32> to vector<4x512xf32>
    %c76 = arith.constant 76 : index
    %c0_64 = arith.constant 0 : index
    %59 = vector.load %arg6[%c76, %c0_64] : memref<108x512xf32, #tpu.memory_space<vmem>>, vector<4x512xf32>
    tpu.vector_store %arg6[%c76, %c0_64], %58 {strides = array<i32>} : memref<108x512xf32, #tpu.memory_space<vmem>>, vector<4x512xf32>,
    %c0_65 = arith.constant 0 : index
    %c0_66 = arith.constant 0 : index
    %c130 = arith.constant 130 : index
    %60 = vector.load %arg2[%c0_65, %c0_66, %c130] : memref<1x4x768xf32, #tpu.memory_space<vmem>>, vector<1x4x512xf32>
    %61 = vector.shape_cast %60 : vector<1x4x512xf32> to vector<4x512xf32>
    %c80_67 = arith.constant 80 : index
    %c0_68 = arith.constant 0 : index
    %62 = vector.load %arg6[%c80_67, %c0_68] : memref<108x512xf32, #tpu.memory_space<vmem>>, vector<4x512xf32>
    tpu.vector_store %arg6[%c80_67, %c0_68], %61 {strides = array<i32>} : memref<108x512xf32, #tpu.memory_space<vmem>>, vector<4x512xf32>,
    %c0_69 = arith.constant 0 : index
    %c0_70 = arith.constant 0 : index
    %c136 = arith.constant 136 : index
    %63 = vector.load %arg2[%c0_69, %c0_70, %c136] : memref<1x4x768xf32, #tpu.memory_space<vmem>>, vector<1x4x512xf32>
    %64 = vector.shape_cast %63 : vector<1x4x512xf32> to vector<4x512xf32>
    %c84 = arith.constant 84 : index
    %c0_71 = arith.constant 0 : index
    %65 = vector.load %arg6[%c84, %c0_71] : memref<108x512xf32, #tpu.memory_space<vmem>>, vector<4x512xf32>
    tpu.vector_store %arg6[%c84, %c0_71], %64 {strides = array<i32>} : memref<108x512xf32, #tpu.memory_space<vmem>>, vector<4x512xf32>,
    %c0_72 = arith.constant 0 : index
    %c0_73 = arith.constant 0 : index
    %c137 = arith.constant 137 : index
    %66 = vector.load %arg2[%c0_72, %c0_73, %c137] : memref<1x4x768xf32, #tpu.memory_space<vmem>>, vector<1x4x512xf32>
    %67 = vector.shape_cast %66 : vector<1x4x512xf32> to vector<4x512xf32>
    %c88 = arith.constant 88 : index
    %c0_74 = arith.constant 0 : index
    %68 = vector.load %arg6[%c88, %c0_74] : memref<108x512xf32, #tpu.memory_space<vmem>>, vector<4x512xf32>
    tpu.vector_store %arg6[%c88, %c0_74], %67 {strides = array<i32>} : memref<108x512xf32, #tpu.memory_space<vmem>>, vector<4x512xf32>,
    %c0_75 = arith.constant 0 : index
    %c0_76 = arith.constant 0 : index
    %c138 = arith.constant 138 : index
    %69 = vector.load %arg2[%c0_75, %c0_76, %c138] : memref<1x4x768xf32, #tpu.memory_space<vmem>>, vector<1x4x512xf32>
    %70 = vector.shape_cast %69 : vector<1x4x512xf32> to vector<4x512xf32>
    %c92 = arith.constant 92 : index
    %c0_77 = arith.constant 0 : index
    %71 = vector.load %arg6[%c92, %c0_77] : memref<108x512xf32, #tpu.memory_space<vmem>>, vector<4x512xf32>
    tpu.vector_store %arg6[%c92, %c0_77], %70 {strides = array<i32>} : memref<108x512xf32, #tpu.memory_space<vmem>>, vector<4x512xf32>,
    %c0_78 = arith.constant 0 : index
    %c0_79 = arith.constant 0 : index
    %c144 = arith.constant 144 : index
    %72 = vector.load %arg2[%c0_78, %c0_79, %c144] : memref<1x4x768xf32, #tpu.memory_space<vmem>>, vector<1x4x512xf32>
    %73 = vector.shape_cast %72 : vector<1x4x512xf32> to vector<4x512xf32>
    %c96 = arith.constant 96 : index
    %c0_80 = arith.constant 0 : index
    %74 = vector.load %arg6[%c96, %c0_80] : memref<108x512xf32, #tpu.memory_space<vmem>>, vector<4x512xf32>
    tpu.vector_store %arg6[%c96, %c0_80], %73 {strides = array<i32>} : memref<108x512xf32, #tpu.memory_space<vmem>>, vector<4x512xf32>,
    %c0_81 = arith.constant 0 : index
    %c0_82 = arith.constant 0 : index
    %c145 = arith.constant 145 : index
    %75 = vector.load %arg2[%c0_81, %c0_82, %c145] : memref<1x4x768xf32, #tpu.memory_space<vmem>>, vector<1x4x512xf32>
    %76 = vector.shape_cast %75 : vector<1x4x512xf32> to vector<4x512xf32>
    %c100 = arith.constant 100 : index
    %c0_83 = arith.constant 0 : index
    %77 = vector.load %arg6[%c100, %c0_83] : memref<108x512xf32, #tpu.memory_space<vmem>>, vector<4x512xf32>
    tpu.vector_store %arg6[%c100, %c0_83], %76 {strides = array<i32>} : memref<108x512xf32, #tpu.memory_space<vmem>>, vector<4x512xf32>,
    %c0_84 = arith.constant 0 : index
    %c0_85 = arith.constant 0 : index
    %c146 = arith.constant 146 : index
    %78 = vector.load %arg2[%c0_84, %c0_85, %c146] : memref<1x4x768xf32, #tpu.memory_space<vmem>>, vector<1x4x512xf32>
    %79 = vector.shape_cast %78 : vector<1x4x512xf32> to vector<4x512xf32>
    %c104 = arith.constant 104 : index
    %c0_86 = arith.constant 0 : index
    %80 = vector.load %arg6[%c104, %c0_86] : memref<108x512xf32, #tpu.memory_space<vmem>>, vector<4x512xf32>
    tpu.vector_store %arg6[%c104, %c0_86], %79 {strides = array<i32>} : memref<108x512xf32, #tpu.memory_space<vmem>>, vector<4x512xf32>,
    %c0_87 = arith.constant 0 : index
    %c0_88 = arith.constant 0 : index
    %81 = vector.load %arg3[%c0_87, %c0_88] : memref<8x108xf32, #tpu.memory_space<vmem>>, vector<8x108xf32>
    %c0_89 = arith.constant 0 : index
    %c0_90 = arith.constant 0 : index
    %82 = vector.load %arg6[%c0_89, %c0_90] : memref<108x512xf32, #tpu.memory_space<vmem>>, vector<108x512xf32>
    %cst = arith.constant dense<0.000000e+00> : vector<8x512xf32>
    %83 = tpu.matmul %81, %82, %cst {dimension_numbers = #tpu.dot_dimension_numbers<[1], [0], [0], [1], [0, 0, 1, 1], [], []>} : vector<8x108xf32>, vector<108x512xf32>, vector<8x512xf32> -> vector<8x512xf32>
    %c0_91 = arith.constant 0 : index
    %c0_92 = arith.constant 0 : index
    %84 = vector.load %arg4[%c0_91, %c0_92] : memref<8x1xf32, #tpu.memory_space<vmem>>, vector<8x1xf32>
    %85 = vector.broadcast %84 : vector<8x1xf32> to vector<8x512xf32>
    %86 = arith.addf %83, %85 : vector<8x512xf32>
    %cst_93 = arith.constant 0.000000e+00 : f32
    %87 = vector.broadcast %cst_93 : f32 to vector<8x512xf32>
    %88 = arith.maximumf %86, %87 : vector<8x512xf32>
    %c0_94 = arith.constant 0 : index
    %c0_95 = arith.constant 0 : index
    %c0_96 = arith.constant 0 : index
    %89 = vector.load %arg5[%c0_94, %c0_95, %c0_96] : memref<1x8x512xf32, #tpu.memory_space<vmem>>, vector<1x8x512xf32>
    %90 = vector.shape_cast %89 : vector<1x8x512xf32> to vector<8x512xf32>
    %91 = vector.shape_cast %88 : vector<8x512xf32> to vector<1x8x512xf32>
    tpu.vector_store %arg5[%c0_94, %c0_95, %c0_96], %91 {strides = array<i32>} : memref<1x8x512xf32, #tpu.memory_space<vmem>>, vector<1x8x512xf32>,
    return
  }
  func.func @transform_0(%arg0: i32, %arg1: i32) -> (i32, i32, i32) {
    %c0_i32 = arith.constant 0 : i32
    %c0_i32_0 = arith.constant 0 : i32
    %c0_i32_1 = arith.constant 0 : i32
    return %arg0, %c0_i32, %c0_i32_0 : i32, i32, i32
  }
  func.func @transform_1(%arg0: i32, %arg1: i32) -> (i32, i32) {
    %c0_i32 = arith.constant 0 : i32
    %c0_i32_0 = arith.constant 0 : i32
    %c0_i32_1 = arith.constant 0 : i32
    return %c0_i32, %c0_i32_0 : i32, i32
  }
  func.func @transform_2(%arg0: i32, %arg1: i32) -> (i32, i32) {
    %c0_i32 = arith.constant 0 : i32
    %c0_i32_0 = arith.constant 0 : i32
    %c0_i32_1 = arith.constant 0 : i32
    return %c0_i32, %c0_i32_0 : i32, i32
  }
  func.func @transform_3(%arg0: i32, %arg1: i32) -> (i32, i32, i32) {
    %c0_i32 = arith.constant 0 : i32
    %c0_i32_0 = arith.constant 0 : i32
    return %arg0, %c0_i32, %arg1 : i32, i32, i32
  }
}

</mosaic_0001>

<llo_original>
// kernel: tpu_custom_call.1
$region0: #{tpu_custom_call.1}
  #allocation0 [shape = 'u32[]', space=smem, size = 0x4, offset = 0x4, fixed_abs, tag = 'smem constant byte address 0x4 - core index']
  #allocation1 [shape = 'u32[144,128]{1,0:T(1,128)}', space=vmem, size = 0x12000, scoped, tag = 'internal scratch']
  #allocation2 [shape = 'f32[108,512]{1,0:T(8,128)}', space=vmem, size = 0x38000, scoped, tag = 'scratch operand']
  %s0 = inlined_call_operand.hbm [shape: f32[2,4,768], index: 0, kind: input, shape index: {}]
  %s1 = inlined_call_operand.vmem [shape: f32[8,108], index: 1, kind: input, shape index: {}]
  %s2 = inlined_call_operand.vmem [shape: f32[8,1], index: 2, kind: input, shape index: {}]
  %s3 = inlined_call_operand.hbm [shape: f32[2,8,512], index: 3, kind: output, shape index: {}]
  %s4 = sld [smem:[#allocation0]]
  $region49: #{tpu_custom_call.1} parent=0
    _
  %s6 = ssub.s32 1, %s4
  %s7 = scalar_select 0, %s6, %s4
  $region1: #{tpu_custom_call.1} parent=0
    #allocation3 [shape = 'u8[24576]{0}', space=vmem, size = 0x6000, scoped, tag = 'input window, operand 0']
    #allocation4 [shape = 's32[2]{0}', space=sflag, size = 0x8, scoped, tag = 'scoped memory for tpu_custom_call.1']
    #allocation5 [shape = 's32[2]{0}', space=sflag, size = 0x8, scoped, tag = 'scoped memory for tpu_custom_call.1']
    #allocation6 [shape = 'u8[32768]{0}', space=vmem, size = 0x8000, scoped, tag = 'output window, operand 0']
    %8 = vsyncpa [#allocation4], 0
    %s9 = scalar_lea.sflag [#allocation4], 1
    %10 = vsyncpa %s9, 0
    %11 = vsyncpa [#allocation5], 0
    %s12 = scalar_lea.sflag [#allocation5], 1
    %13 = vsyncpa %s12, 0
    loop: start=0, step=1, limit=4
    $region2: #{tpu_custom_call.1} parent=1 // loop_pre_header
      _
    $region3: #{tpu_custom_call.1} parent=1 // loop_header
      %s15 = sphi 0, %s19
      %p16 = scmp.ge.s32.totalorder %s15, 4
      %s22 = sphi 0, %s34
      %s23 = sphi 0, %s30
      %s24 = sphi 0, %s22
      %s25 = sphi 0, %s23
      %s26 = sphi 0, %s24
      %s27 = sphi 0, %s25
      %s37 = sphi 0, %s39
      %s40 = sphi 0, %s37
      %s41 = sphi 0, %s40
      %s57 = sphi 0, %s41
      %s61 = sphi 0, %s61
      %s63 = sphi 0, %s61
      %s64 = sphi 0, %s63
      %s78 = sphi 0, %s64
      %s82 = sphi 0, %s82
      %s84 = sphi 0, %s82
      %s85 = sphi 0, %s84
      %s99 = sphi 0, %s85
      %s107 = sphi 0, %s109
      %s110 = sphi 0, %s107
      %s111 = sphi 0, %s110
      %s127 = sphi 0, %s111
    $region4: #{tpu_custom_call.1} parent=1 // loop_header_branch
      %18 = sbr.rel (%p16) target = $region8
    $region5: #{tpu_custom_call.1} parent=1 // loop_body
      %s20 = ssub.s32 %s15, 1
      %s21 = ssub.s32 %s15, 2
      %s28 = sadd.s32 1, %s23
      %p29 = scmp.ge.s32.totalorder %s28, 1
      %s30 = scalar_select %p29, 0, %s28
      %s31 = sadd.s32 1, %s22
      %s32 = scalar_select %p29, %s31, %s22
      %p33 = scmp.ge.s32.totalorder %s32, 2
      %s34 = scalar_select %p33, 0, %s32
      %s35 = ssub.s32 %s22, %s34
      %p36 = scmp.eq.s32.totalorder %s35, 0
      %s38 = sadd.s32 %s37, 1
      %s39 = scalar_select %p36, %s37, %s38
      %p42 = pneg %p36
      %p43 = scmp.eq.s32.totalorder %s15, 1
      %p44 = por %p42, %p43
      %p45 = scmp.ne.s32.totalorder %s37, %s40
      %p46 = scmp.eq.s32.totalorder %s15, 0
      %p47 = por %p45, %p46
      %p48 = scmp.ne.s32.totalorder %s37, %s40
      %p49 = scmp.eq.s32.totalorder %s20, 1
      %p50 = por %p48, %p49
      %p51 = scmp.ne.s32.totalorder %s40, %s41
      %p52 = scmp.eq.s32.totalorder %s20, 0
      %p53 = por %p51, %p52
      %p54 = scmp.ne.s32.totalorder %s40, %s41
      %p55 = scmp.eq.s32.totalorder %s21, 1
      %p56 = por %p54, %p55
      %p58 = scmp.ne.s32.totalorder %s41, %s57
      %p59 = scmp.eq.s32.totalorder %s21, 0
      %p60 = por %p58, %p59
      %s62 = sadd.s32 %s61, 1
      %p65 = scmp.eq.s32.totalorder %s15, 1
      %p66 = scmp.ne.s32.totalorder %s61, %s63
      %p67 = scmp.eq.s32.totalorder %s15, 0
      %p68 = por %p66, %p67
      %p69 = scmp.ne.s32.totalorder %s61, %s63
      %p70 = scmp.eq.s32.totalorder %s20, 1
      %p71 = por %p69, %p70
      %p72 = scmp.ne.s32.totalorder %s63, %s64
      %p73 = scmp.eq.s32.totalorder %s20, 0
      %p74 = por %p72, %p73
      %p75 = scmp.ne.s32.totalorder %s63, %s64
      %p76 = scmp.eq.s32.totalorder %s21, 1
      %p77 = por %p75, %p76
      %p79 = scmp.ne.s32.totalorder %s64, %s78
      %p80 = scmp.eq.s32.totalorder %s21, 0
      %p81 = por %p79, %p80
      %s83 = sadd.s32 %s82, 1
      %p86 = scmp.eq.s32.totalorder %s15, 1
      %p87 = scmp.ne.s32.totalorder %s82, %s84
      %p88 = scmp.eq.s32.totalorder %s15, 0
      %p89 = por %p87, %p88
      %p90 = scmp.ne.s32.totalorder %s82, %s84
      %p91 = scmp.eq.s32.totalorder %s20, 1
      %p92 = por %p90, %p91
      %p93 = scmp.ne.s32.totalorder %s84, %s85
      %p94 = scmp.eq.s32.totalorder %s20, 0
      %p95 = por %p93, %p94
      %p96 = scmp.ne.s32.totalorder %s84, %s85
      %p97 = scmp.eq.s32.totalorder %s21, 1
      %p98 = por %p96, %p97
      %p100 = scmp.ne.s32.totalorder %s85, %s99
      %p101 = scmp.eq.s32.totalorder %s21, 0
      %p102 = por %p100, %p101
      %s103 = ssub.s32 %s22, %s34
      %s104 = ssub.s32 %s23, %s30
      %s105 = sor.u32 %s103, %s104
      %p106 = scmp.eq.s32.totalorder %s105, 0
      %s108 = sadd.s32 %s107, 1
      %s109 = scalar_select %p106, %s107, %s108
      %p112 = pneg %p106
      %p113 = scmp.eq.s32.totalorder %s15, 1
      %p114 = por %p112, %p113
      %p115 = scmp.ne.s32.totalorder %s107, %s110
      %p116 = scmp.eq.s32.totalorder %s15, 0
      %p117 = por %p115, %p116
      %p118 = scmp.ne.s32.totalorder %s107, %s110
      %p119 = scmp.eq.s32.totalorder %s20, 1
      %p120 = por %p118, %p119
      %p121 = scmp.ne.s32.totalorder %s110, %s111
      %p122 = scmp.eq.s32.totalorder %s20, 0
      %p123 = por %p121, %p122
      %p124 = scmp.ne.s32.totalorder %s110, %s111
      %p125 = scmp.eq.s32.totalorder %s21, 1
      %p126 = por %p124, %p125
      %p128 = scmp.ne.s32.totalorder %s111, %s127
      %p129 = scmp.eq.s32.totalorder %s21, 0
      %p130 = por %p128, %p129
      %p131 = scmp.le.s32.totalorder 1, %s15
      %p132 = scmp.lt.s32.totalorder %s15, 3
      %p133 = pnand %p131, %p132
      %p134 = pneg %p133
      // Predicated region
      $region9: #{tpu_custom_call.1} parent=5 // pred_check
        _
      $region10: #{tpu_custom_call.1} parent=5 // pred_check_branch
        %136 = sbr.rel (%p133) target = $region12
      $region11: #{tpu_custom_call.1} parent=5 // pred_region
        %s137 = ssub.s32 %s15, 1
        // Predicated region
        $region13: #{tpu_custom_call.1} parent=11 // pred_check
          %p138 = pneg %p74
        $region14: #{tpu_custom_call.1} parent=11 // pred_check_branch
          %140 = sbr.rel (%p138) target = $region16
        $region15: #{tpu_custom_call.1} parent=11 // pred_region
          _
        $region16: #{tpu_custom_call.1} parent=11 // pred_fallthru
          _
        // Predicated region
        $region17: #{tpu_custom_call.1} parent=11 // pred_check
          %p141 = pneg %p95
        $region18: #{tpu_custom_call.1} parent=11 // pred_check_branch
          %143 = sbr.rel (%p141) target = $region20
        $region19: #{tpu_custom_call.1} parent=11 // pred_region
          _
        $region20: #{tpu_custom_call.1} parent=11 // pred_fallthru
          _
      $region12: #{tpu_custom_call.1} parent=5 // pred_fallthru
        _
      %p144 = scmp.lt.s32.totalorder %s15, 2
      // Predicated region
      $region21: #{tpu_custom_call.1} parent=5 // pred_check
        %p145 = pneg %p144
      $region22: #{tpu_custom_call.1} parent=5 // pred_check_branch
        %147 = sbr.rel (%p145) target = $region24
      $region23: #{tpu_custom_call.1} parent=5 // pred_region
        // Predicated region
        $region25: #{tpu_custom_call.1} parent=23 // pred_check
          %p148 = pneg %p47
        $region26: #{tpu_custom_call.1} parent=23 // pred_check_branch
          %150 = sbr.rel (%p148) target = $region28
        $region27: #{tpu_custom_call.1} parent=23 // pred_region
          %s151 = sand.u32 %s37, 1
          %s152 = scalar_lea.sflag [#allocation4], %s151
          %s153 = sand.u32 %s37, 1
          %s154 = smul.addr %s153, 24
          %s155 = scalar_lea.vmem [#allocation3], %s154
          %s157 = ssub.s32 384, 384
          %158 = vsyncadd %s152, %s157
          %s159 = smul.addr %s22, 6
          %s160 = smul.addr %s159, 64
          %s161 = scalar_lea.hbm %s0, %s160
          %s163 = sshll.u32 %s155, 4
          %s164 = int_to_ptr.vmem [resolvable:$true] %s163
          %166 = dma.hbm_to_vmem [thread:$0]  %s161, 384, %s164, %s152
        $region28: #{tpu_custom_call.1} parent=23 // pred_fallthru
          _
      $region24: #{tpu_custom_call.1} parent=5 // pred_fallthru
        _
      %p167 = scmp.le.s32.totalorder 1, %s15
      %p168 = scmp.lt.s32.totalorder %s15, 3
      %p169 = pnand %p167, %p168
      %p170 = pneg %p169
      // Predicated region
      $region29: #{tpu_custom_call.1} parent=5 // pred_check
        _
      $region30: #{tpu_custom_call.1} parent=5 // pred_check_branch
        %172 = sbr.rel (%p169) target = $region32
      $region31: #{tpu_custom_call.1} parent=5 // pred_region
        %s173 = ssub.s32 %s15, 1
        %s174 = sand.u32 %s40, 1
        %s175 = scalar_lea.sflag [#allocation4], %s174
        %s176 = sand.u32 %s40, 1
        %s177 = smul.addr %s176, 24
        %s178 = scalar_lea.vmem [#allocation3], %s177
        // Predicated region
        $region33: #{tpu_custom_call.1} parent=31 // pred_check
          %p179 = pneg %p53
        $region34: #{tpu_custom_call.1} parent=31 // pred_check_branch
          %181 = sbr.rel (%p179) target = $region36
        $region35: #{tpu_custom_call.1} parent=31 // pred_region
          %182 = dma.done %s175, 384
        $region36: #{tpu_custom_call.1} parent=31 // pred_fallthru
          _
        %s183 = sand.u32 %s40, 1
        %s184 = scalar_lea.sflag [#allocation4], %s183
        %s185 = sand.u32 %s40, 1
        %s186 = smul.addr %s185, 24
        %s187 = scalar_lea.vmem [#allocation3], %s186
        %p188 = pneg %p53
        %p189 = pneg %p50
        %p190 = pneg %p74
        %p191 = pneg %p71
        %p192 = pneg %p95
        %p193 = pneg %p92
        %p194 = pneg %p123
        %p195 = pneg %p120
        %s196 = sand.u32 %s110, 1
        %s197 = scalar_lea.sflag [#allocation5], %s196
        %s198 = sand.u32 %s110, 1
        %s199 = smul.addr %s198, 32
        %s200 = scalar_lea.vmem [#allocation6], %s199
        %s201 = smul.u32 4, %s25
        %v202 = vld [vmem:[%s178] sm:$0xff]
        %v203 = vld [vmem:[%s178 + $0x8] sm:$0xff]
        %v206 = vcombine.high %v202, %v202
        %v207 = vcombine.high %v203, %v203
        %210 = vst [vmem:[#allocation2] sm:$0xf] %v202
        %211 = vst [vmem:[#allocation2 + $0x8] sm:$0xf] %v206
        %212 = vst [vmem:[#allocation2 + $0x10] sm:$0xf] %v203
        %213 = vst [vmem:[#allocation2 + $0x18] sm:$0xf] %v207
        %v214 = vld [vmem:[%s178] sm:$0xff]
        %v215 = vld [vmem:[%s178 + $0x8] sm:$0xff]
        %v216 = vld [vmem:[%s178 + $0x10] sm:$0xf]
        %v220 = vcombine.low %v214, %v214
        %v221 = vcombine.low %v215, %v215
        %v222 = vcombine.low %v216, %v216
        %223 = vrot.lane.b32.xlu0 %v220, 127
        %v224 = vpop.permute.xlu0 %223
        %225 = vrot.lane.b32.xlu0 %v214, 127
        %v226 = vpop.permute.xlu0 %225
        %227 = vrot.lane.b32.xlu0 %v221, 127
        %v228 = vpop.permute.xlu0 %227
        %229 = vrot.lane.b32.xlu0 %v215, 127
        %v230 = vpop.permute.xlu0 %229
        %231 = vrot.lane.b32.xlu0 %v222, 127
        %v232 = vpop.permute.xlu0 %231
        %vm233 = vcmask 1039360
        %v234 = vsel %vm233, %v224, %v226
        %v235 = vsel %vm233, %v226, %v228
        %v236 = vsel %vm233, %v228, %v230
        %v237 = vsel %vm233, %v230, %v232
        %242 = vst [vmem:[#allocation2] sm:$0xf0] %v234
        %243 = vst [vmem:[#allocation2 + $0x8] sm:$0xf0] %v235
        %244 = vst [vmem:[#allocation2 + $0x10] sm:$0xf0] %v236
        %245 = vst [vmem:[#allocation2 + $0x18] sm:$0xf0] %v237
        %v246 = vld [vmem:[%s178] sm:$0xff]
        %v247 = vld [vmem:[%s178 + $0x8] sm:$0xff]
        %v248 = vld [vmem:[%s178 + $0x10] sm:$0xf]
        %v252 = vcombine.high %v246, %v246
        %v253 = vcombine.high %v247, %v247
        %254 = vrot.lane.b32.xlu0 %v246, 126
        %v255 = vpop.permute.xlu0 %254
        %256 = vrot.lane.b32.xlu0 %v252, 126
        %v257 = vpop.permute.xlu0 %256
        %258 = vrot.lane.b32.xlu0 %v247, 126
        %v259 = vpop.permute.xlu0 %258
        %260 = vrot.lane.b32.xlu0 %v253, 126
        %v261 = vpop.permute.xlu0 %260
        %262 = vrot.lane.b32.xlu0 %v248, 126
        %v263 = vpop.permute.xlu0 %262
        %vm264 = vcmask 1031168
        %v265 = vsel %vm264, %v255, %v257
        %v266 = vsel %vm264, %v257, %v259
        %v267 = vsel %vm264, %v259, %v261
        %v268 = vsel %vm264, %v261, %v263
        %273 = vst [vmem:[#allocation2 + $0x20] sm:$0xf] %v265
        %274 = vst [vmem:[#allocation2 + $0x28] sm:$0xf] %v266
        %275 = vst [vmem:[#allocation2 + $0x30] sm:$0xf] %v267
        %276 = vst [vmem:[#allocation2 + $0x38] sm:$0xf] %v268
        %v277 = vld [vmem:[%s178] sm:$0xff]
        %v278 = vld [vmem:[%s178 + $0x8] sm:$0xff]
        %v279 = vld [vmem:[%s178 + $0x10] sm:$0xf]
        %v283 = vcombine.low %v277, %v277
        %v284 = vcombine.low %v278, %v278
        %v285 = vcombine.low %v279, %v279
        %286 = vrot.lane.b32.xlu0 %v283, 120
        %v287 = vpop.permute.xlu0 %286
        %288 = vrot.lane.b32.xlu0 %v277, 120
        %v289 = vpop.permute.xlu0 %288
        %290 = vrot.lane.b32.xlu0 %v284, 120
        %v291 = vpop.permute.xlu0 %290
        %292 = vrot.lane.b32.xlu0 %v278, 120
        %v293 = vpop.permute.xlu0 %292
        %294 = vrot.lane.b32.xlu0 %v285, 120
        %v295 = vpop.permute.xlu0 %294
        %vm296 = vcmask 982016
        %v297 = vsel %vm296, %v287, %v289
        %v298 = vsel %vm296, %v289, %v291
        %v299 = vsel %vm296, %v291, %v293
        %v300 = vsel %vm296, %v293, %v295
        %305 = vst [vmem:[#allocation2 + $0x20] sm:$0xf0] %v297
        %306 = vst [vmem:[#allocation2 + $0x28] sm:$0xf0] %v298
        %307 = vst [vmem:[#allocation2 + $0x30] sm:$0xf0] %v299
        %308 = vst [vmem:[#allocation2 + $0x38] sm:$0xf0] %v300
        %v309 = vld [vmem:[%s178] sm:$0xff]
        %v310 = vld [vmem:[%s178 + $0x8] sm:$0xff]
        %v311 = vld [vmem:[%s178 + $0x10] sm:$0xf]
        %v315 = vcombine.high %v309, %v309
        %v316 = vcombine.high %v310, %v310
        %317 = vrot.lane.b32.xlu0 %v309, 119
        %v318 = vpop.permute.xlu0 %317
        %319 = vrot.lane.b32.xlu0 %v315, 119
        %v320 = vpop.permute.xlu0 %319
        %321 = vrot.lane.b32.xlu0 %v310, 119
        %v322 = vpop.permute.xlu0 %321
        %323 = vrot.lane.b32.xlu0 %v316, 119
        %v324 = vpop.permute.xlu0 %323
        %325 = vrot.lane.b32.xlu0 %v311, 119
        %v326 = vpop.permute.xlu0 %325
        %vm327 = vcmask 973824
        %v328 = vsel %vm327, %v318, %v320
        %v329 = vsel %vm327, %v320, %v322
        %v330 = vsel %vm327, %v322, %v324
        %v331 = vsel %vm327, %v324, %v326
        %336 = vst [vmem:[#allocation2 + $0x40] sm:$0xf] %v328
        %337 = vst [vmem:[#allocation2 + $0x48] sm:$0xf] %v329
        %338 = vst [vmem:[#allocation2 + $0x50] sm:$0xf] %v330
        %339 = vst [vmem:[#allocation2 + $0x58] sm:$0xf] %v331
        %v340 = vld [vmem:[%s178] sm:$0xff]
        %v341 = vld [vmem:[%s178 + $0x8] sm:$0xff]
        %v342 = vld [vmem:[%s178 + $0x10] sm:$0xf]
        %v346 = vcombine.low %v340, %v340
        %v347 = vcombine.low %v341, %v341
        %v348 = vcombine.low %v342, %v342
        %349 = vrot.lane.b32.xlu0 %v346, 118
        %v350 = vpop.permute.xlu0 %349
        %351 = vrot.lane.b32.xlu0 %v340, 118
        %v352 = vpop.permute.xlu0 %351
        %353 = vrot.lane.b32.xlu0 %v347, 118
        %v354 = vpop.permute.xlu0 %353
        %355 = vrot.lane.b32.xlu0 %v341, 118
        %v356 = vpop.permute.xlu0 %355
        %357 = vrot.lane.b32.xlu0 %v348, 118
        %v358 = vpop.permute.xlu0 %357
        %vm359 = vcmask 965632
        %v360 = vsel %vm359, %v350, %v352
        %v361 = vsel %vm359, %v352, %v354
        %v362 = vsel %vm359, %v354, %v356
        %v363 = vsel %vm359, %v356, %v358
        %368 = vst [vmem:[#allocation2 + $0x40] sm:$0xf0] %v360
        %369 = vst [vmem:[#allocation2 + $0x48] sm:$0xf0] %v361
        %370 = vst [vmem:[#allocation2 + $0x50] sm:$0xf0] %v362
        %371 = vst [vmem:[#allocation2 + $0x58] sm:$0xf0] %v363
        %v372 = vld [vmem:[%s178] sm:$0xff]
        %v373 = vld [vmem:[%s178 + $0x8] sm:$0xff]
        %v374 = vld [vmem:[%s178 + $0x10] sm:$0xf]
        %v378 = vcombine.high %v372, %v372
        %v379 = vcombine.high %v373, %v373
        %380 = vrot.lane.b32.xlu0 %v372, 112
        %v381 = vpop.permute.xlu0 %380
        %382 = vrot.lane.b32.xlu0 %v378, 112
        %v383 = vpop.permute.xlu0 %382
        %384 = vrot.lane.b32.xlu0 %v373, 112
        %v385 = vpop.permute.xlu0 %384
        %386 = vrot.lane.b32.xlu0 %v379, 112
        %v387 = vpop.permute.xlu0 %386
        %388 = vrot.lane.b32.xlu0 %v374, 112
        %v389 = vpop.permute.xlu0 %388
        %vm390 = vcmask 916480
        %v391 = vsel %vm390, %v381, %v383
        %v392 = vsel %vm390, %v383, %v385
        %v393 = vsel %vm390, %v385, %v387
        %v394 = vsel %vm390, %v387, %v389
        %399 = vst [vmem:[#allocation2 + $0x60] sm:$0xf] %v391
        %400 = vst [vmem:[#allocation2 + $0x68] sm:$0xf] %v392
        %401 = vst [vmem:[#allocation2 + $0x70] sm:$0xf] %v393
        %402 = vst [vmem:[#allocation2 + $0x78] sm:$0xf] %v394
        %v403 = vld [vmem:[%s178] sm:$0xff]
        %v404 = vld [vmem:[%s178 + $0x8] sm:$0xff]
        %v405 = vld [vmem:[%s178 + $0x10] sm:$0xf]
        %v409 = vcombine.low %v403, %v403
        %v410 = vcombine.low %v404, %v404
        %v411 = vcombine.low %v405, %v405
        %412 = vrot.lane.b32.xlu0 %v409, 111
        %v413 = vpop.permute.xlu0 %412
        %414 = vrot.lane.b32.xlu0 %v403, 111
        %v415 = vpop.permute.xlu0 %414
        %416 = vrot.lane.b32.xlu0 %v410, 111
        %v417 = vpop.permute.xlu0 %416
        %418 = vrot.lane.b32.xlu0 %v404, 111
        %v419 = vpop.permute.xlu0 %418
        %420 = vrot.lane.b32.xlu0 %v411, 111
        %v421 = vpop.permute.xlu0 %420
        %vm422 = vcmask 908288
        %v423 = vsel %vm422, %v413, %v415
        %v424 = vsel %vm422, %v415, %v417
        %v425 = vsel %vm422, %v417, %v419
        %v426 = vsel %vm422, %v419, %v421
        %431 = vst [vmem:[#allocation2 + $0x60] sm:$0xf0] %v423
        %432 = vst [vmem:[#allocation2 + $0x68] sm:$0xf0] %v424
        %433 = vst [vmem:[#allocation2 + $0x70] sm:$0xf0] %v425
        %434 = vst [vmem:[#allocation2 + $0x78] sm:$0xf0] %v426
        %v435 = vld [vmem:[%s178] sm:$0xff]
        %v436 = vld [vmem:[%s178 + $0x8] sm:$0xff]
        %v437 = vld [vmem:[%s178 + $0x10] sm:$0xf]
        %v441 = vcombine.high %v435, %v435
        %v442 = vcombine.high %v436, %v436
        %443 = vrot.lane.b32.xlu0 %v435, 110
        %v444 = vpop.permute.xlu0 %443
        %445 = vrot.lane.b32.xlu0 %v441, 110
        %v446 = vpop.permute.xlu0 %445
        %447 = vrot.lane.b32.xlu0 %v436, 110
        %v448 = vpop.permute.xlu0 %447
        %449 = vrot.lane.b32.xlu0 %v442, 110
        %v450 = vpop.permute.xlu0 %449
        %451 = vrot.lane.b32.xlu0 %v437, 110
        %v452 = vpop.permute.xlu0 %451
        %vm453 = vcmask 900096
        %v454 = vsel %vm453, %v444, %v446
        %v455 = vsel %vm453, %v446, %v448
        %v456 = vsel %vm453, %v448, %v450
        %v457 = vsel %vm453, %v450, %v452
        %462 = vst [vmem:[#allocation2 + $0x80] sm:$0xf] %v454
        %463 = vst [vmem:[#allocation2 + $0x88] sm:$0xf] %v455
        %464 = vst [vmem:[#allocation2 + $0x90] sm:$0xf] %v456
        %465 = vst [vmem:[#allocation2 + $0x98] sm:$0xf] %v457
        %v466 = vld [vmem:[%s178] sm:$0xff]
        %v467 = vld [vmem:[%s178 + $0x8] sm:$0xff]
        %v468 = vld [vmem:[%s178 + $0x10] sm:$0xf]
        %v472 = vcombine.low %v466, %v466
        %v473 = vcombine.low %v467, %v467
        %v474 = vcombine.low %v468, %v468
        %475 = vrot.lane.b32.xlu0 %v472, 64
        %v476 = vpop.permute.xlu0 %475
        %477 = vrot.lane.b32.xlu0 %v466, 64
        %v478 = vpop.permute.xlu0 %477
        %479 = vrot.lane.b32.xlu0 %v473, 64
        %v480 = vpop.permute.xlu0 %479
        %481 = vrot.lane.b32.xlu0 %v467, 64
        %v482 = vpop.permute.xlu0 %481
        %483 = vrot.lane.b32.xlu0 %v474, 64
        %v484 = vpop.permute.xlu0 %483
        %vm485 = vcmask 523264
        %v486 = vsel %vm485, %v476, %v478
        %v487 = vsel %vm485, %v478, %v480
        %v488 = vsel %vm485, %v480, %v482
        %v489 = vsel %vm485, %v482, %v484
        %494 = vst [vmem:[#allocation2 + $0x80] sm:$0xf0] %v486
        %495 = vst [vmem:[#allocation2 + $0x88] sm:$0xf0] %v487
        %496 = vst [vmem:[#allocation2 + $0x90] sm:$0xf0] %v488
        %497 = vst [vmem:[#allocation2 + $0x98] sm:$0xf0] %v489
        %v498 = vld [vmem:[%s178] sm:$0xff]
        %v499 = vld [vmem:[%s178 + $0x8] sm:$0xff]
        %v500 = vld [vmem:[%s178 + $0x10] sm:$0xf]
        %v504 = vcombine.high %v498, %v498
        %v505 = vcombine.high %v499, %v499
        %506 = vrot.lane.b32.xlu0 %v498, 63
        %v507 = vpop.permute.xlu0 %506
        %508 = vrot.lane.b32.xlu0 %v504, 63
        %v509 = vpop.permute.xlu0 %508
        %510 = vrot.lane.b32.xlu0 %v499, 63
        %v511 = vpop.permute.xlu0 %510
        %512 = vrot.lane.b32.xlu0 %v505, 63
        %v513 = vpop.permute.xlu0 %512
        %514 = vrot.lane.b32.xlu0 %v500, 63
        %v515 = vpop.permute.xlu0 %514
        %vm516 = vcmask 515072
        %v517 = vsel %vm516, %v507, %v509
        %v518 = vsel %vm516, %v509, %v511
        %v519 = vsel %vm516, %v511, %v513
        %v520 = vsel %vm516, %v513, %v515
        %525 = vst [vmem:[#allocation2 + $0xa0] sm:$0xf] %v517
        %526 = vst [vmem:[#allocation2 + $0xa8] sm:$0xf] %v518
        %527 = vst [vmem:[#allocation2 + $0xb0] sm:$0xf] %v519
        %528 = vst [vmem:[#allocation2 + $0xb8] sm:$0xf] %v520
        %v529 = vld [vmem:[%s178] sm:$0xff]
        %v530 = vld [vmem:[%s178 + $0x8] sm:$0xff]
        %v531 = vld [vmem:[%s178 + $0x10] sm:$0xf]
        %v535 = vcombine.low %v529, %v529
        %v536 = vcombine.low %v530, %v530
        %v537 = vcombine.low %v531, %v531
        %538 = vrot.lane.b32.xlu0 %v535, 62
        %v539 = vpop.permute.xlu0 %538
        %540 = vrot.lane.b32.xlu0 %v529, 62
        %v541 = vpop.permute.xlu0 %540
        %542 = vrot.lane.b32.xlu0 %v536, 62
        %v543 = vpop.permute.xlu0 %542
        %544 = vrot.lane.b32.xlu0 %v530, 62
        %v545 = vpop.permute.xlu0 %544
        %546 = vrot.lane.b32.xlu0 %v537, 62
        %v547 = vpop.permute.xlu0 %546
        %vm548 = vcmask 506880
        %v549 = vsel %vm548, %v539, %v541
        %v550 = vsel %vm548, %v541, %v543
        %v551 = vsel %vm548, %v543, %v545
        %v552 = vsel %vm548, %v545, %v547
        %557 = vst [vmem:[#allocation2 + $0xa0] sm:$0xf0] %v549
        %558 = vst [vmem:[#allocation2 + $0xa8] sm:$0xf0] %v550
        %559 = vst [vmem:[#allocation2 + $0xb0] sm:$0xf0] %v551
        %560 = vst [vmem:[#allocation2 + $0xb8] sm:$0xf0] %v552
        %v561 = vld [vmem:[%s178] sm:$0xff]
        %v562 = vld [vmem:[%s178 + $0x8] sm:$0xff]
        %v563 = vld [vmem:[%s178 + $0x10] sm:$0xf]
        %v567 = vcombine.high %v561, %v561
        %v568 = vcombine.high %v562, %v562
        %569 = vrot.lane.b32.xlu0 %v561, 56
        %v570 = vpop.permute.xlu0 %569
        %571 = vrot.lane.b32.xlu0 %v567, 56
        %v572 = vpop.permute.xlu0 %571
        %573 = vrot.lane.b32.xlu0 %v562, 56
        %v574 = vpop.permute.xlu0 %573
        %575 = vrot.lane.b32.xlu0 %v568, 56
        %v576 = vpop.permute.xlu0 %575
        %577 = vrot.lane.b32.xlu0 %v563, 56
        %v578 = vpop.permute.xlu0 %577
        %vm579 = vcmask 457728
        %v580 = vsel %vm579, %v570, %v572
        %v581 = vsel %vm579, %v572, %v574
        %v582 = vsel %vm579, %v574, %v576
        %v583 = vsel %vm579, %v576, %v578
        %588 = vst [vmem:[#allocation2 + $0xc0] sm:$0xf] %v580
        %589 = vst [vmem:[#allocation2 + $0xc8] sm:$0xf] %v581
        %590 = vst [vmem:[#allocation2 + $0xd0] sm:$0xf] %v582
        %591 = vst [vmem:[#allocation2 + $0xd8] sm:$0xf] %v583
        %v592 = vld [vmem:[%s178] sm:$0xff]
        %v593 = vld [vmem:[%s178 + $0x8] sm:$0xff]
        %v594 = vld [vmem:[%s178 + $0x10] sm:$0xf]
        %v598 = vcombine.low %v592, %v592
        %v599 = vcombine.low %v593, %v593
        %v600 = vcombine.low %v594, %v594
        %601 = vrot.lane.b32.xlu0 %v598, 55
        %v602 = vpop.permute.xlu0 %601
        %603 = vrot.lane.b32.xlu0 %v592, 55
        %v604 = vpop.permute.xlu0 %603
        %605 = vrot.lane.b32.xlu0 %v599, 55
        %v606 = vpop.permute.xlu0 %605
        %607 = vrot.lane.b32.xlu0 %v593, 55
        %v608 = vpop.permute.xlu0 %607
        %609 = vrot.lane.b32.xlu0 %v600, 55
        %v610 = vpop.permute.xlu0 %609
        %vm611 = vcmask 449536
        %v612 = vsel %vm611, %v602, %v604
        %v613 = vsel %vm611, %v604, %v606
        %v614 = vsel %vm611, %v606, %v608
        %v615 = vsel %vm611, %v608, %v610
        %620 = vst [vmem:[#allocation2 + $0xc0] sm:$0xf0] %v612
        %621 = vst [vmem:[#allocation2 + $0xc8] sm:$0xf0] %v613
        %622 = vst [vmem:[#allocation2 + $0xd0] sm:$0xf0] %v614
        %623 = vst [vmem:[#allocation2 + $0xd8] sm:$0xf0] %v615
        %v624 = vld [vmem:[%s178] sm:$0xff]
        %v625 = vld [vmem:[%s178 + $0x8] sm:$0xff]
        %v626 = vld [vmem:[%s178 + $0x10] sm:$0xf]
        %v630 = vcombine.high %v624, %v624
        %v631 = vcombine.high %v625, %v625
        %632 = vrot.lane.b32.xlu0 %v624, 54
        %v633 = vpop.permute.xlu0 %632
        %634 = vrot.lane.b32.xlu0 %v630, 54
        %v635 = vpop.permute.xlu0 %634
        %636 = vrot.lane.b32.xlu0 %v625, 54
        %v637 = vpop.permute.xlu0 %636
        %638 = vrot.lane.b32.xlu0 %v631, 54
        %v639 = vpop.permute.xlu0 %638
        %640 = vrot.lane.b32.xlu0 %v626, 54
        %v641 = vpop.permute.xlu0 %640
        %vm642 = vcmask 441344
        %v643 = vsel %vm642, %v633, %v635
        %v644 = vsel %vm642, %v635, %v637
        %v645 = vsel %vm642, %v637, %v639
        %v646 = vsel %vm642, %v639, %v641
        %651 = vst [vmem:[#allocation2 + $0xe0] sm:$0xf] %v643
        %652 = vst [vmem:[#allocation2 + $0xe8] sm:$0xf] %v644
        %653 = vst [vmem:[#allocation2 + $0xf0] sm:$0xf] %v645
        %654 = vst [vmem:[#allocation2 + $0xf8] sm:$0xf] %v646
        %v655 = vld [vmem:[%s178] sm:$0xff]
        %v656 = vld [vmem:[%s178 + $0x8] sm:$0xff]
        %v657 = vld [vmem:[%s178 + $0x10] sm:$0xf]
        %v661 = vcombine.low %v655, %v655
        %v662 = vcombine.low %v656, %v656
        %v663 = vcombine.low %v657, %v657
        %664 = vrot.lane.b32.xlu0 %v661, 48
        %v665 = vpop.permute.xlu0 %664
        %666 = vrot.lane.b32.xlu0 %v655, 48
        %v667 = vpop.permute.xlu0 %666
        %668 = vrot.lane.b32.xlu0 %v662, 48
        %v669 = vpop.permute.xlu0 %668
        %670 = vrot.lane.b32.xlu0 %v656, 48
        %v671 = vpop.permute.xlu0 %670
        %672 = vrot.lane.b32.xlu0 %v663, 48
        %v673 = vpop.permute.xlu0 %672
        %vm674 = vcmask 392192
        %v675 = vsel %vm674, %v665, %v667
        %v676 = vsel %vm674, %v667, %v669
        %v677 = vsel %vm674, %v669, %v671
        %v678 = vsel %vm674, %v671, %v673
        %683 = vst [vmem:[#allocation2 + $0xe0] sm:$0xf0] %v675
        %684 = vst [vmem:[#allocation2 + $0xe8] sm:$0xf0] %v676
        %685 = vst [vmem:[#allocation2 + $0xf0] sm:$0xf0] %v677
        %686 = vst [vmem:[#allocation2 + $0xf8] sm:$0xf0] %v678
        %v687 = vld [vmem:[%s178] sm:$0xff]
        %v688 = vld [vmem:[%s178 + $0x8] sm:$0xff]
        %v689 = vld [vmem:[%s178 + $0x10] sm:$0xf]
        %v693 = vcombine.high %v687, %v687
        %v694 = vcombine.high %v688, %v688
        %695 = vrot.lane.b32.xlu0 %v687, 47
        %v696 = vpop.permute.xlu0 %695
        %697 = vrot.lane.b32.xlu0 %v693, 47
        %v698 = vpop.permute.xlu0 %697
        %699 = vrot.lane.b32.xlu0 %v688, 47
        %v700 = vpop.permute.xlu0 %699
        %701 = vrot.lane.b32.xlu0 %v694, 47
        %v702 = vpop.permute.xlu0 %701
        %703 = vrot.lane.b32.xlu0 %v689, 47
        %v704 = vpop.permute.xlu0 %703
        %vm705 = vcmask 384000
        %v706 = vsel %vm705, %v696, %v698
        %v707 = vsel %vm705, %v698, %v700
        %v708 = vsel %vm705, %v700, %v702
        %v709 = vsel %vm705, %v702, %v704
        %714 = vst [vmem:[#allocation2 + $0x100] sm:$0xf] %v706
        %715 = vst [vmem:[#allocation2 + $0x108] sm:$0xf] %v707
        %716 = vst [vmem:[#allocation2 + $0x110] sm:$0xf] %v708
        %717 = vst [vmem:[#allocation2 + $0x118] sm:$0xf] %v709
        %v718 = vld [vmem:[%s178] sm:$0xff]
        %v719 = vld [vmem:[%s178 + $0x8] sm:$0xff]
        %v720 = vld [vmem:[%s178 + $0x10] sm:$0xf]
        %v724 = vcombine.low %v718, %v718
        %v725 = vcombine.low %v719, %v719
        %v726 = vcombine.low %v720, %v720
        %727 = vrot.lane.b32.xlu0 %v724, 46
        %v728 = vpop.permute.xlu0 %727
        %729 = vrot.lane.b32.xlu0 %v718, 46
        %v730 = vpop.permute.xlu0 %729
        %731 = vrot.lane.b32.xlu0 %v725, 46
        %v732 = vpop.permute.xlu0 %731
        %733 = vrot.lane.b32.xlu0 %v719, 46
        %v734 = vpop.permute.xlu0 %733
        %735 = vrot.lane.b32.xlu0 %v726, 46
        %v736 = vpop.permute.xlu0 %735
        %vm737 = vcmask 375808
        %v738 = vsel %vm737, %v728, %v730
        %v739 = vsel %vm737, %v730, %v732
        %v740 = vsel %vm737, %v732, %v734
        %v741 = vsel %vm737, %v734, %v736
        %746 = vst [vmem:[#allocation2 + $0x100] sm:$0xf0] %v738
        %747 = vst [vmem:[#allocation2 + $0x108] sm:$0xf0] %v739
        %748 = vst [vmem:[#allocation2 + $0x110] sm:$0xf0] %v740
        %749 = vst [vmem:[#allocation2 + $0x118] sm:$0xf0] %v741
        %v750 = vld [vmem:[%s178 + $0x4] sm:$0xff]
        %v751 = vld [vmem:[%s178 + $0xc] sm:$0xff]
        %v754 = vcombine.high %v750, %v750
        %v755 = vcombine.high %v751, %v751
        %758 = vst [vmem:[#allocation2 + $0x120] sm:$0xf] %v750
        %759 = vst [vmem:[#allocation2 + $0x128] sm:$0xf] %v754
        %760 = vst [vmem:[#allocation2 + $0x130] sm:$0xf] %v751
        %761 = vst [vmem:[#allocation2 + $0x138] sm:$0xf] %v755
        %v762 = vld [vmem:[%s178 + $0x4] sm:$0xff]
        %v763 = vld [vmem:[%s178 + $0xc] sm:$0xff]
        %v764 = vld [vmem:[%s178 + $0x14] sm:$0xf]
        %v768 = vcombine.low %v762, %v762
        %v769 = vcombine.low %v763, %v763
        %v770 = vcombine.low %v764, %v764
        %771 = vrot.lane.b32.xlu0 %v768, 127
        %v772 = vpop.permute.xlu0 %771
        %773 = vrot.lane.b32.xlu0 %v762, 127
        %v774 = vpop.permute.xlu0 %773
        %775 = vrot.lane.b32.xlu0 %v769, 127
        %v776 = vpop.permute.xlu0 %775
        %777 = vrot.lane.b32.xlu0 %v763, 127
        %v778 = vpop.permute.xlu0 %777
        %779 = vrot.lane.b32.xlu0 %v770, 127
        %v780 = vpop.permute.xlu0 %779
        %v781 = vsel %vm233, %v772, %v774
        %v782 = vsel %vm233, %v774, %v776
        %v783 = vsel %vm233, %v776, %v778
        %v784 = vsel %vm233, %v778, %v780
        %789 = vst [vmem:[#allocation2 + $0x120] sm:$0xf0] %v781
        %790 = vst [vmem:[#allocation2 + $0x128] sm:$0xf0] %v782
        %791 = vst [vmem:[#allocation2 + $0x130] sm:$0xf0] %v783
        %792 = vst [vmem:[#allocation2 + $0x138] sm:$0xf0] %v784
        %v793 = vld [vmem:[%s178 + $0x4] sm:$0xff]
        %v794 = vld [vmem:[%s178 + $0xc] sm:$0xff]
        %v795 = vld [vmem:[%s178 + $0x14] sm:$0xf]
        %v799 = vcombine.high %v793, %v793
        %v800 = vcombine.high %v794, %v794
        %801 = vrot.lane.b32.xlu0 %v793, 126
        %v802 = vpop.permute.xlu0 %801
        %803 = vrot.lane.b32.xlu0 %v799, 126
        %v804 = vpop.permute.xlu0 %803
        %805 = vrot.lane.b32.xlu0 %v794, 126
        %v806 = vpop.permute.xlu0 %805
        %807 = vrot.lane.b32.xlu0 %v800, 126
        %v808 = vpop.permute.xlu0 %807
        %809 = vrot.lane.b32.xlu0 %v795, 126
        %v810 = vpop.permute.xlu0 %809
        %v811 = vsel %vm264, %v802, %v804
        %v812 = vsel %vm264, %v804, %v806
        %v813 = vsel %vm264, %v806, %v808
        %v814 = vsel %vm264, %v808, %v810
        %819 = vst [vmem:[#allocation2 + $0x140] sm:$0xf] %v811
        %820 = vst [vmem:[#allocation2 + $0x148] sm:$0xf] %v812
        %821 = vst [vmem:[#allocation2 + $0x150] sm:$0xf] %v813
        %822 = vst [vmem:[#allocation2 + $0x158] sm:$0xf] %v814
        %v823 = vld [vmem:[%s178 + $0x4] sm:$0xff]
        %v824 = vld [vmem:[%s178 + $0xc] sm:$0xff]
        %v825 = vld [vmem:[%s178 + $0x14] sm:$0xf]
        %v829 = vcombine.low %v823, %v823
        %v830 = vcombine.low %v824, %v824
        %v831 = vcombine.low %v825, %v825
        %832 = vrot.lane.b32.xlu0 %v829, 120
        %v833 = vpop.permute.xlu0 %832
        %834 = vrot.lane.b32.xlu0 %v823, 120
        %v835 = vpop.permute.xlu0 %834
        %836 = vrot.lane.b32.xlu0 %v830, 120
        %v837 = vpop.permute.xlu0 %836
        %838 = vrot.lane.b32.xlu0 %v824, 120
        %v839 = vpop.permute.xlu0 %838
        %840 = vrot.lane.b32.xlu0 %v831, 120
        %v841 = vpop.permute.xlu0 %840
        %v842 = vsel %vm296, %v833, %v835
        %v843 = vsel %vm296, %v835, %v837
        %v844 = vsel %vm296, %v837, %v839
        %v845 = vsel %vm296, %v839, %v841
        %850 = vst [vmem:[#allocation2 + $0x140] sm:$0xf0] %v842
        %851 = vst [vmem:[#allocation2 + $0x148] sm:$0xf0] %v843
        %852 = vst [vmem:[#allocation2 + $0x150] sm:$0xf0] %v844
        %853 = vst [vmem:[#allocation2 + $0x158] sm:$0xf0] %v845
        %v854 = vld [vmem:[%s178 + $0x4] sm:$0xff]
        %v855 = vld [vmem:[%s178 + $0xc] sm:$0xff]
        %v856 = vld [vmem:[%s178 + $0x14] sm:$0xf]
        %v860 = vcombine.high %v854, %v854
        %v861 = vcombine.high %v855, %v855
        %862 = vrot.lane.b32.xlu0 %v854, 119
        %v863 = vpop.permute.xlu0 %862
        %864 = vrot.lane.b32.xlu0 %v860, 119
        %v865 = vpop.permute.xlu0 %864
        %866 = vrot.lane.b32.xlu0 %v855, 119
        %v867 = vpop.permute.xlu0 %866
        %868 = vrot.lane.b32.xlu0 %v861, 119
        %v869 = vpop.permute.xlu0 %868
        %870 = vrot.lane.b32.xlu0 %v856, 119
        %v871 = vpop.permute.xlu0 %870
        %v872 = vsel %vm327, %v863, %v865
        %v873 = vsel %vm327, %v865, %v867
        %v874 = vsel %vm327, %v867, %v869
        %v875 = vsel %vm327, %v869, %v871
        %880 = vst [vmem:[#allocation2 + $0x160] sm:$0xf] %v872
        %881 = vst [vmem:[#allocation2 + $0x168] sm:$0xf] %v873
        %882 = vst [vmem:[#allocation2 + $0x170] sm:$0xf] %v874
        %883 = vst [vmem:[#allocation2 + $0x178] sm:$0xf] %v875
        %v884 = vld [vmem:[%s178 + $0x4] sm:$0xff]
        %v885 = vld [vmem:[%s178 + $0xc] sm:$0xff]
        %v886 = vld [vmem:[%s178 + $0x14] sm:$0xf]
        %v890 = vcombine.low %v884, %v884
        %v891 = vcombine.low %v885, %v885
        %v892 = vcombine.low %v886, %v886
        %893 = vrot.lane.b32.xlu0 %v890, 118
        %v894 = vpop.permute.xlu0 %893
        %895 = vrot.lane.b32.xlu0 %v884, 118
        %v896 = vpop.permute.xlu0 %895
        %897 = vrot.lane.b32.xlu0 %v891, 118
        %v898 = vpop.permute.xlu0 %897
        %899 = vrot.lane.b32.xlu0 %v885, 118
        %v900 = vpop.permute.xlu0 %899
        %901 = vrot.lane.b32.xlu0 %v892, 118
        %v902 = vpop.permute.xlu0 %901
        %v903 = vsel %vm359, %v894, %v896
        %v904 = vsel %vm359, %v896, %v898
        %v905 = vsel %vm359, %v898, %v900
        %v906 = vsel %vm359, %v900, %v902
        %911 = vst [vmem:[#allocation2 + $0x160] sm:$0xf0] %v903
        %912 = vst [vmem:[#allocation2 + $0x168] sm:$0xf0] %v904
        %913 = vst [vmem:[#allocation2 + $0x170] sm:$0xf0] %v905
        %914 = vst [vmem:[#allocation2 + $0x178] sm:$0xf0] %v906
        %v915 = vld [vmem:[%s178 + $0x4] sm:$0xff]
        %v916 = vld [vmem:[%s178 + $0xc] sm:$0xff]
        %v917 = vld [vmem:[%s178 + $0x14] sm:$0xf]
        %v921 = vcombine.high %v915, %v915
        %v922 = vcombine.high %v916, %v916
        %923 = vrot.lane.b32.xlu0 %v915, 112
        %v924 = vpop.permute.xlu0 %923
        %925 = vrot.lane.b32.xlu0 %v921, 112
        %v926 = vpop.permute.xlu0 %925
        %927 = vrot.lane.b32.xlu0 %v916, 112
        %v928 = vpop.permute.xlu0 %927
        %929 = vrot.lane.b32.xlu0 %v922, 112
        %v930 = vpop.permute.xlu0 %929
        %931 = vrot.lane.b32.xlu0 %v917, 112
        %v932 = vpop.permute.xlu0 %931
        %v933 = vsel %vm390, %v924, %v926
        %v934 = vsel %vm390, %v926, %v928
        %v935 = vsel %vm390, %v928, %v930
        %v936 = vsel %vm390, %v930, %v932
        %941 = vst [vmem:[#allocation2 + $0x180] sm:$0xf] %v933
        %942 = vst [vmem:[#allocation2 + $0x188] sm:$0xf] %v934
        %943 = vst [vmem:[#allocation2 + $0x190] sm:$0xf] %v935
        %944 = vst [vmem:[#allocation2 + $0x198] sm:$0xf] %v936
        %v945 = vld [vmem:[%s178 + $0x4] sm:$0xff]
        %v946 = vld [vmem:[%s178 + $0xc] sm:$0xff]
        %v947 = vld [vmem:[%s178 + $0x14] sm:$0xf]
        %v951 = vcombine.low %v945, %v945
        %v952 = vcombine.low %v946, %v946
        %v953 = vcombine.low %v947, %v947
        %954 = vrot.lane.b32.xlu0 %v951, 111
        %v955 = vpop.permute.xlu0 %954
        %956 = vrot.lane.b32.xlu0 %v945, 111
        %v957 = vpop.permute.xlu0 %956
        %958 = vrot.lane.b32.xlu0 %v952, 111
        %v959 = vpop.permute.xlu0 %958
        %960 = vrot.lane.b32.xlu0 %v946, 111
        %v961 = vpop.permute.xlu0 %960
        %962 = vrot.lane.b32.xlu0 %v953, 111
        %v963 = vpop.permute.xlu0 %962
        %v964 = vsel %vm422, %v955, %v957
        %v965 = vsel %vm422, %v957, %v959
        %v966 = vsel %vm422, %v959, %v961
        %v967 = vsel %vm422, %v961, %v963
        %972 = vst [vmem:[#allocation2 + $0x180] sm:$0xf0] %v964
        %973 = vst [vmem:[#allocation2 + $0x188] sm:$0xf0] %v965
        %974 = vst [vmem:[#allocation2 + $0x190] sm:$0xf0] %v966
        %975 = vst [vmem:[#allocation2 + $0x198] sm:$0xf0] %v967
        %v976 = vld [vmem:[%s178 + $0x4] sm:$0xff]
        %v977 = vld [vmem:[%s178 + $0xc] sm:$0xff]
        %v978 = vld [vmem:[%s178 + $0x14] sm:$0xf]
        %v982 = vcombine.high %v976, %v976
        %v983 = vcombine.high %v977, %v977
        %984 = vrot.lane.b32.xlu0 %v976, 110
        %v985 = vpop.permute.xlu0 %984
        %986 = vrot.lane.b32.xlu0 %v982, 110
        %v987 = vpop.permute.xlu0 %986
        %988 = vrot.lane.b32.xlu0 %v977, 110
        %v989 = vpop.permute.xlu0 %988
        %990 = vrot.lane.b32.xlu0 %v983, 110
        %v991 = vpop.permute.xlu0 %990
        %992 = vrot.lane.b32.xlu0 %v978, 110
        %v993 = vpop.permute.xlu0 %992
        %v994 = vsel %vm453, %v985, %v987
        %v995 = vsel %vm453, %v987, %v989
        %v996 = vsel %vm453, %v989, %v991
        %v997 = vsel %vm453, %v991, %v993
        %1002 = vst [vmem:[#allocation2 + $0x1a0] sm:$0xf] %v994
        %1003 = vst [vmem:[#allocation2 + $0x1a8] sm:$0xf] %v995
        %1004 = vst [vmem:[#allocation2 + $0x1b0] sm:$0xf] %v996
        %1005 = vst [vmem:[#allocation2 + $0x1b8] sm:$0xf] %v997
        %v1006 = vld [vmem:[%s1] sm:$0xff]
        %v1007 = vld [vmem:[#allocation2] sm:$0xff]
        %v1008 = vld [vmem:[#allocation2 + $0x8] sm:$0xff]
        %v1009 = vld [vmem:[#allocation2 + $0x10] sm:$0xff]
        %v1010 = vld [vmem:[#allocation2 + $0x18] sm:$0xff]
        %v1011 = vld [vmem:[#allocation2 + $0x20] sm:$0xff]
        %v1012 = vld [vmem:[#allocation2 + $0x28] sm:$0xff]
        %v1013 = vld [vmem:[#allocation2 + $0x30] sm:$0xff]
        %v1014 = vld [vmem:[#allocation2 + $0x38] sm:$0xff]
        %v1015 = vld [vmem:[#allocation2 + $0x40] sm:$0xff]
        %v1016 = vld [vmem:[#allocation2 + $0x48] sm:$0xff]
        %v1017 = vld [vmem:[#allocation2 + $0x50] sm:$0xff]
        %v1018 = vld [vmem:[#allocation2 + $0x58] sm:$0xff]
        %v1019 = vld [vmem:[#allocation2 + $0x60] sm:$0xff]
        %v1020 = vld [vmem:[#allocation2 + $0x68] sm:$0xff]
        %v1021 = vld [vmem:[#allocation2 + $0x70] sm:$0xff]
        %v1022 = vld [vmem:[#allocation2 + $0x78] sm:$0xff]
        %v1023 = vld [vmem:[#allocation2 + $0x80] sm:$0xff]
        %v1024 = vld [vmem:[#allocation2 + $0x88] sm:$0xff]
        %v1025 = vld [vmem:[#allocation2 + $0x90] sm:$0xff]
        %v1026 = vld [vmem:[#allocation2 + $0x98] sm:$0xff]
        %v1027 = vld [vmem:[#allocation2 + $0xa0] sm:$0xff]
        %v1028 = vld [vmem:[#allocation2 + $0xa8] sm:$0xff]
        %v1029 = vld [vmem:[#allocation2 + $0xb0] sm:$0xff]
        %v1030 = vld [vmem:[#allocation2 + $0xb8] sm:$0xff]
        %v1031 = vld [vmem:[#allocation2 + $0xc0] sm:$0xff]
        %v1032 = vld [vmem:[#allocation2 + $0xc8] sm:$0xff]
        %v1033 = vld [vmem:[#allocation2 + $0xd0] sm:$0xff]
        %v1034 = vld [vmem:[#allocation2 + $0xd8] sm:$0xff]
        %v1035 = vld [vmem:[#allocation2 + $0xe0] sm:$0xff]
        %v1036 = vld [vmem:[#allocation2 + $0xe8] sm:$0xff]
        %v1037 = vld [vmem:[#allocation2 + $0xf0] sm:$0xff]
        %v1038 = vld [vmem:[#allocation2 + $0xf8] sm:$0xff]
        %v1039 = vld [vmem:[#allocation2 + $0x100] sm:$0xff]
        %v1040 = vld [vmem:[#allocation2 + $0x108] sm:$0xff]
        %v1041 = vld [vmem:[#allocation2 + $0x110] sm:$0xff]
        %v1042 = vld [vmem:[#allocation2 + $0x118] sm:$0xff]
        %v1043 = vld [vmem:[#allocation2 + $0x120] sm:$0xff]
        %v1044 = vld [vmem:[#allocation2 + $0x128] sm:$0xff]
        %v1045 = vld [vmem:[#allocation2 + $0x130] sm:$0xff]
        %v1046 = vld [vmem:[#allocation2 + $0x138] sm:$0xff]
        %v1047 = vld [vmem:[#allocation2 + $0x140] sm:$0xff]
        %v1048 = vld [vmem:[#allocation2 + $0x148] sm:$0xff]
        %v1049 = vld [vmem:[#allocation2 + $0x150] sm:$0xff]
        %v1050 = vld [vmem:[#allocation2 + $0x158] sm:$0xff]
        %v1051 = vld [vmem:[#allocation2 + $0x160] sm:$0xff]
        %v1052 = vld [vmem:[#allocation2 + $0x168] sm:$0xff]
        %v1053 = vld [vmem:[#allocation2 + $0x170] sm:$0xff]
        %v1054 = vld [vmem:[#allocation2 + $0x178] sm:$0xff]
        %v1055 = vld [vmem:[#allocation2 + $0x180] sm:$0xff]
        %v1056 = vld [vmem:[#allocation2 + $0x188] sm:$0xff]
        %v1057 = vld [vmem:[#allocation2 + $0x190] sm:$0xff]
        %v1058 = vld [vmem:[#allocation2 + $0x198] sm:$0xff]
        %v1059 = vld [vmem:[#allocation2 + $0x1a0] sm:$0xf]
        %v1060 = vld [vmem:[#allocation2 + $0x1a8] sm:$0xf]
        %v1061 = vld [vmem:[#allocation2 + $0x1b0] sm:$0xf]
        %v1062 = vld [vmem:[#allocation2 + $0x1b8] sm:$0xf]
        %v1063 = vld [vmem:[%s2] sm:$0xff]
        %1065 = vset.pattern.permute.xlu0 0
        %1066 = vperm.xlu0 %1065, %v1063
        %v1067 = vpop.permute.xlu0 %1066
        %vm1069 = vcmask 883712
        %v1071 = vsel %vm1069, %v1006, 0
        %vm1073 = vcmask 1043456
        %v1075 = vsel %vm1073, %v1059, 0
        %v1078 = vsel %vm1073, %v1060, 0
        %v1081 = vsel %vm1073, %v1061, 0
        %v1084 = vsel %vm1073, %v1062, 0
        %1086 = vmatprep.subr.mxu0 %v1008
        %1087 = vmatpush1.msra.mxu0 %v1007
        %1088 = vmatprep.subr.mxu0 %v1012
        %1089 = vmatpush1.msra.mxu0 %v1011
        %1090 = vmatprep.subr.mxu0 %v1016
        %1091 = vmatpush1.msra.mxu0 %v1015
        %1092 = vmatprep.subr.mxu0 %v1020
        %1093 = vmatpush1.msra.mxu0 %v1019
        %1094 = vmatprep.subr.mxu0 %v1024
        %1095 = vmatpush1.msra.mxu0 %v1023
        %1096 = vmatprep.subr.mxu0 %v1028
        %1097 = vmatpush1.msra.mxu0 %v1027
        %1098 = vmatprep.subr.mxu0 %v1032
        %1099 = vmatpush1.msra.mxu0 %v1031
        %1100 = vmatprep.subr.mxu0 %v1036
        %1101 = vmatpush1.msra.mxu0 %v1035
        %1102 = vmatprep.subr.mxu0 %v1040
        %1103 = vmatpush1.msra.mxu0 %v1039
        %1104 = vmatprep.subr.mxu0 %v1044
        %1105 = vmatpush1.msra.mxu0 %v1043
        %1106 = vmatprep.subr.mxu0 %v1048
        %1107 = vmatpush1.msra.mxu0 %v1047
        %1108 = vmatprep.subr.mxu0 %v1052
        %1109 = vmatpush1.msra.mxu0 %v1051
        %1110 = vmatprep.subr.mxu0 %v1056
        %1111 = vmatpush1.msra.mxu0 %v1055
        %1112 = vmatprep.subr.mxu0 %v1078
        %1113 = vmatpush1.msra.mxu0 %v1075
        %1114 = vmatprep.subr.mxu0 0.0
        %1115 = vmatpush1.msra.mxu0 0.0
        %1116 = vmatprep.subr.mxu0 0.0
        %1117 = vmatpush1.msra.mxu0 0.0
        %1118 = vmatprep.subr.mxu0 0.0
        %1119 = vmatpush1.msra.mxu0 0.0
        %1120 = vmatprep.subr.mxu0 0.0
        %1121 = vmatpush1.msra.mxu0 0.0
        %1122 = vmatprep.subr.mxu0 0.0
        %1123 = vmatpush1.msra.mxu0 0.0
        %1124 = vmatprep.subr.mxu0 0.0
        %1125 = vmatpush1.msra.mxu0 0.0
        %1126 = vmatprep.subr.mxu0 0.0
        %1127 = vmatpush1.msra.mxu0 0.0
        %1128 = vmatprep.subr.mxu0 0.0
        %1129 = vmatpush1.msra.mxu0 0.0
        %1130 = vmatprep.subr.mxu0 0.0
        %1131 = vmatpush1.msra.mxu0 0.0
        %1132 = vmatprep.subr.mxu0 0.0
        %1133 = vmatpush1.msra.mxu0 0.0
        %1134 = vmatprep.subr.mxu0 0.0
        %1135 = vmatpush1.msra.mxu0 0.0
        %1136 = vmatprep.subr.mxu0 0.0
        %1137 = vmatpush1.msra.mxu0 0.0
        %1138 = vmatprep.subr.mxu0 0.0
        %1139 = vmatpush1.msra.mxu0 0.0
        %1140 = vmatprep.subr.mxu0 0.0
        %1141 = vmatpush1.msra.mxu0 0.0
        %1142 = vmatprep.subr.mxu0 0.0
        %1143 = vmatpush1.msra.mxu0 0.0
        %1144 = vmatprep.subr.mxu0 0.0
        %1145 = vmatpush1.msra.mxu0 0.0
        %1146 = vmatprep.subr.mxu0 0.0
        %1147 = vmatpush1.msra.mxu0 0.0
        %1148 = vmatprep.subr.mxu0 0.0
        %1149 = vmatpush1.msra.mxu0 0.0
        %1150 = vmatprep.mubr.f32.mxu0 0.0
        %1151 = vmatmul.mubr.f32.gmra.mrb[0].mxu0 %v1071
        %v1152 = vpop.f32.mrb[0].mxu0
        %v1153 = vadd.f32 %v1067, %v1152
        %v1154 = vpop.f32.mrb[0].mxu0
        %v1155 = vadd.f32 %v1067, %v1154
        %1156 = vdwg.mxu0
        %1157 = vmatprep.subr.mxu0 %v1010
        %1158 = vmatpush1.msra.mxu0 %v1009
        %1159 = vmatprep.subr.mxu0 %v1014
        %1160 = vmatpush1.msra.mxu0 %v1013
        %1161 = vmatprep.subr.mxu0 %v1018
        %1162 = vmatpush1.msra.mxu0 %v1017
        %1163 = vmatprep.subr.mxu0 %v1022
        %1164 = vmatpush1.msra.mxu0 %v1021
        %1165 = vmatprep.subr.mxu0 %v1026
        %1166 = vmatpush1.msra.mxu0 %v1025
        %1167 = vmatprep.subr.mxu0 %v1030
        %1168 = vmatpush1.msra.mxu0 %v1029
        %1169 = vmatprep.subr.mxu0 %v1034
        %1170 = vmatpush1.msra.mxu0 %v1033
        %1171 = vmatprep.subr.mxu0 %v1038
        %1172 = vmatpush1.msra.mxu0 %v1037
        %1173 = vmatprep.subr.mxu0 %v1042
        %1174 = vmatpush1.msra.mxu0 %v1041
        %1175 = vmatprep.subr.mxu0 %v1046
        %1176 = vmatpush1.msra.mxu0 %v1045
        %1177 = vmatprep.subr.mxu0 %v1050
        %1178 = vmatpush1.msra.mxu0 %v1049
        %1179 = vmatprep.subr.mxu0 %v1054
        %1180 = vmatpush1.msra.mxu0 %v1053
        %1181 = vmatprep.subr.mxu0 %v1058
        %1182 = vmatpush1.msra.mxu0 %v1057
        %1183 = vmatprep.subr.mxu0 %v1084
        %1184 = vmatpush1.msra.mxu0 %v1081
        %1185 = vmatprep.subr.mxu0 0.0
        %1186 = vmatpush1.msra.mxu0 0.0
        %1187 = vmatprep.subr.mxu0 0.0
        %1188 = vmatpush1.msra.mxu0 0.0
        %1189 = vmatprep.subr.mxu0 0.0
        %1190 = vmatpush1.msra.mxu0 0.0
        %1191 = vmatprep.subr.mxu0 0.0
        %1192 = vmatpush1.msra.mxu0 0.0
        %1193 = vmatprep.subr.mxu0 0.0
        %1194 = vmatpush1.msra.mxu0 0.0
        %1195 = vmatprep.subr.mxu0 0.0
        %1196 = vmatpush1.msra.mxu0 0.0
        %1197 = vmatprep.subr.mxu0 0.0
        %1198 = vmatpush1.msra.mxu0 0.0
        %1199 = vmatprep.subr.mxu0 0.0
        %1200 = vmatpush1.msra.mxu0 0.0
        %1201 = vmatprep.subr.mxu0 0.0
        %1202 = vmatpush1.msra.mxu0 0.0
        %1203 = vmatprep.subr.mxu0 0.0
        %1204 = vmatpush1.msra.mxu0 0.0
        %1205 = vmatprep.subr.mxu0 0.0
        %1206 = vmatpush1.msra.mxu0 0.0
        %1207 = vmatprep.subr.mxu0 0.0
        %1208 = vmatpush1.msra.mxu0 0.0
        %1209 = vmatprep.subr.mxu0 0.0
        %1210 = vmatpush1.msra.mxu0 0.0
        %1211 = vmatprep.subr.mxu0 0.0
        %1212 = vmatpush1.msra.mxu0 0.0
        %1213 = vmatprep.subr.mxu0 0.0
        %1214 = vmatpush1.msra.mxu0 0.0
        %1215 = vmatprep.subr.mxu0 0.0
        %1216 = vmatpush1.msra.mxu0 0.0
        %1217 = vmatprep.subr.mxu0 0.0
        %1218 = vmatpush1.msra.mxu0 0.0
        %1219 = vmatprep.subr.mxu0 0.0
        %1220 = vmatpush1.msra.mxu0 0.0
        %1221 = vmatprep.mubr.f32.mxu0 0.0
        %1222 = vmatmul.mubr.f32.gmra.mrb[0].mxu0 %v1071
        %v1223 = vpop.f32.mrb[0].mxu0
        %v1224 = vadd.f32 %v1067, %v1223
        %v1225 = vpop.f32.mrb[0].mxu0
        %v1226 = vadd.f32 %v1067, %v1225
        %1227 = vdwg.mxu0
        %v1228 = vmax.f32 %v1153, 0.0
        %v1229 = vmax.f32 %v1155, 0.0
        %v1230 = vmax.f32 %v1224, 0.0
        %v1231 = vmax.f32 %v1226, 0.0
        %1232 = vst [vmem:[%s200] sm:$0xff] %v1228
        %1233 = vst [vmem:[%s200 + $0x8] sm:$0xff] %v1229
        %1234 = vst [vmem:[%s200 + $0x10] sm:$0xff] %v1230
        %1235 = vst [vmem:[%s200 + $0x18] sm:$0xff] %v1231
        %s1236 = sand.u32 %s110, 1
        %s1237 = scalar_lea.sflag [#allocation5], %s1236
        %s1238 = sand.u32 %s110, 1
        %s1239 = smul.addr %s1238, 32
        %s1240 = scalar_lea.vmem [#allocation6], %s1239
        // Predicated region
        $region37: #{tpu_custom_call.1} parent=31 // pred_check
          %p1241 = pneg %p120
        $region38: #{tpu_custom_call.1} parent=31 // pred_check_branch
          %1243 = sbr.rel (%p1241) target = $region40
        $region39: #{tpu_custom_call.1} parent=31 // pred_region
          %s1244 = smul.u32 4, %s25
          %s1246 = ssub.s32 512, 512
          %1247 = vsyncadd %s1237, %s1246
          %s1248 = smul.addr %s24, 4
          %s1249 = sadd.s32 %s1244, %s1248
          %s1250 = smul.addr %s1249, 128
          %s1251 = scalar_lea.hbm %s3, %s1250
          %s1253 = sshll.u32 %s1240, 4
          %s1254 = int_to_ptr.vmem [resolvable:$true] %s1253
          %1256 = dma.vmem_to_hbm [thread:$0]  %s1254, 512, %s1251, %s1237
        $region40: #{tpu_custom_call.1} parent=31 // pred_fallthru
          _
      $region32: #{tpu_custom_call.1} parent=5 // pred_fallthru
        _
      %p1257 = scmp.le.s32.totalorder 2, %s15
      // Predicated region
      $region41: #{tpu_custom_call.1} parent=5 // pred_check
        %p1258 = pneg %p1257
      $region42: #{tpu_custom_call.1} parent=5 // pred_check_branch
        %1260 = sbr.rel (%p1258) target = $region44
      $region43: #{tpu_custom_call.1} parent=5 // pred_region
        %s1261 = ssub.s32 %s15, 2
        // Predicated region
        $region45: #{tpu_custom_call.1} parent=43 // pred_check
          %p1262 = pneg %p126
        $region46: #{tpu_custom_call.1} parent=43 // pred_check_branch
          %1264 = sbr.rel (%p1262) target = $region48
        $region47: #{tpu_custom_call.1} parent=43 // pred_region
          %s1265 = sand.u32 %s111, 1
          %s1266 = scalar_lea.sflag [#allocation5], %s1265
          %s1267 = sand.u32 %s111, 1
          %s1268 = smul.addr %s1267, 32
          %s1269 = scalar_lea.vmem [#allocation6], %s1268
          %1270 = dma.done %s1266, 512
        $region48: #{tpu_custom_call.1} parent=43 // pred_fallthru
          _
      $region44: #{tpu_custom_call.1} parent=5 // pred_fallthru
        _
    $region6: #{tpu_custom_call.1} parent=1 // loop_footer
      %s19 = sadd.s32 1, %s15
    $region7: #{tpu_custom_call.1} parent=1 // loop_footer_branch
      %14 = sbr.rel target = $region3
    $region8: #{tpu_custom_call.1} parent=1 // loop_exit
      _
    %1271 = vsyncpa [#allocation4], 1
    %s1272 = scalar_lea.sflag [#allocation4], 1
    %1273 = vsyncpa %s1272, 1
    %1274 = vsyncpa [#allocation5], 1
    %s1275 = scalar_lea.sflag [#allocation5], 1
    %1276 = vsyncpa %s1275, 1

</llo_original>
